<compile_context>
chip_gen: v6e
topology: v6e:2x2x1
jax: 0.10.0
libtpu: 0.0.40
codegen_flags: <defaults>
</compile_context>

<pallas_src>
import numpy as np
import jax
import jax.numpy as jnp
from jax.experimental import pallas as pl
from jax.experimental.pallas import tpu as pltpu

# Small, self-consistent configuration (structure mirrors the PyTorch module;
# sizes shrunk so everything fits comfortably in VMEM as whole-array blocks).
CONFIG = dict(max_z=50, hidden_channels=32, k=10, num_layers=4)
CONV1D_CHANNELS = (16, 32)
CONV2_K = 5

H = CONFIG['hidden_channels']
NL = CONFIG['num_layers']
K = CONFIG['k']
K_PAD = 16                       # k padded up to a multiple of 8 (sublane align)
D_TOTAL = NL * H + 1             # 129 == torch total_latent_dim
D_FEAT = NL * H                  # 128  (lane-dense GCN feature output)
D_PAD = 256                      # D_TOTAL padded to a multiple of 128
L_OUT = K // 2 - CONV2_K + 1     # conv2 output length (=1)
DENSE_DIM = L_OUT * CONV1D_CHANNELS[1]

# TODO(synk): for large graphs (N >~ 2-3k on v7x's 64 MiB VMEM) the dense
# A_hat whole-array block must be replaced by a tiled (N/TM, N/TK) grid with a
# VMEM accumulator and a graph-parallel leading axis; not needed at demo size.


def _full_spec(x):
    """Whole-array BlockSpec for a grid=(1,) pallas_call."""
    nd = x.ndim
    return pl.BlockSpec(x.shape, lambda i, _nd=nd: (0,) * _nd)


_COMPILER_PARAMS = pltpu.CompilerParams(
    dimension_semantics=("arbitrary",),
    vmem_limit_bytes=32 * 1024 * 1024,
)


# ----------------------------------------------------------------------------
# Kernel 1: GCN stack.  xs[i+1] = tanh( A_hat @ (xs[i] @ W_i) + b_i )
# Outputs: feat = concat of the 4 hidden layers (N, 128)   [lane-dense]
#          score = last 1-channel layer (N, 1)             [sort key]
# ----------------------------------------------------------------------------
def gcn_stack_kernel(a_ref, x0_ref, ws_ref, bs_ref, wl_ref, bl_ref,
                     feat_ref, score_ref):
    num_layers, h, _ = ws_ref.shape
    # bf16 MXU operands, f32 accumulation; tanh / bias adds stay f32 (v5e-safe).
    a_bf = a_ref[...].astype(jnp.bfloat16)
    x = x0_ref[...]
    for i in range(num_layers):                       # static unrolled loop
        w_bf = ws_ref[i].astype(jnp.bfloat16)         # (H, H)
        xw = jnp.dot(x.astype(jnp.bfloat16), w_bf,
                     preferred_element_type=jnp.float32)
        x = jnp.tanh(jnp.dot(a_bf, xw.astype(jnp.bfloat16),
                             preferred_element_type=jnp.float32) + bs_ref[i])
        # write directly into this layer's lane slice (no concat at the end)
        feat_ref[:, i * h:(i + 1) * h] = x
    xw = jnp.dot(x.astype(jnp.bfloat16), wl_ref[...].astype(jnp.bfloat16),
                 preferred_element_type=jnp.float32)                 # (N, 1)
    score_ref[...] = jnp.tanh(jnp.dot(a_bf, xw.astype(jnp.bfloat16),
                                      preferred_element_type=jnp.float32)
                              + bl_ref[...])


def gcn_stack(a_hat, x0, ws, bs, w_last, b_last):
    n, h = x0.shape
    nl = ws.shape[0]
    d_feat = nl * h
    out_shape = (jax.ShapeDtypeStruct((n, d_feat), jnp.float32),
                 jax.ShapeDtypeStruct((n, 1), jnp.float32))
    return pl.pallas_call(
        gcn_stack_kernel,
        out_shape=out_shape,
        grid=(1,),
        in_specs=[_full_spec(a_hat), _full_spec(x0), _full_spec(ws),
                  _full_spec(bs), _full_spec(w_last), _full_spec(b_last)],
        out_specs=(pl.BlockSpec((n, d_feat), lambda i: (0, 0)),
                   pl.BlockSpec((n, 1), lambda i: (0, 0))),
        compiler_params=_COMPILER_PARAMS,
    )(a_hat, x0, ws, bs, w_last, b_last)


# ----------------------------------------------------------------------------
# Kernel 2: CNN/MLP head, batched over graphs.
#   relu(conv1) -> maxpool(2,2) -> relu(conv2) -> flatten -> relu(lin1)
#   -> dropout(identity, eval) -> lin2
# Inputs p_even/p_odd hold the even/odd sort-pool positions of ALL graphs in
# position-major row order (row = pos*B + b), channel-padded to D_PAD lanes.
# ----------------------------------------------------------------------------
def dgcnn_head_kernel(pe_ref, po_ref, w1_ref, b1_ref, w2_ref, b2_ref,
                      w3_ref, b3_ref, w4_ref, b4_ref, out_ref, flat_ref):
    b_graphs = out_ref.shape[0]
    c1 = w1_ref.shape[1]
    k_half = pe_ref.shape[0] // b_graphs

    w1 = w1_ref[...].astype(jnp.bfloat16)
    # conv1 (Conv1d(1, C1, D, stride=D)) == per-position D->C1 matmul, batched
    # over every (graph, position) row at once.
    y_even = jnp.maximum(
        jnp.dot(pe_ref[...].astype(jnp.bfloat16), w1,
                preferred_element_type=jnp.float32) + b1_ref[...], 0.0)
    y_odd = jnp.maximum(
        jnp.dot(po_ref[...].astype(jnp.bfloat16), w1,
                preferred_element_type=jnp.float32) + b1_ref[...], 0.0)
    # MaxPool1d(2, 2): one VPU max of the even/odd position planes.
    m = jnp.maximum(y_even, y_odd)                    # (k_half*B, C1), pos-major

    # Flatten to torch's per-graph (pos-major, channel-minor) layout via static
    # lane-slice writes into a lane-dense (B, k_half*C1) scratch.
    for p in range(k_half):                           # static, k_half == 8
        flat_ref[:, p * c1:(p + 1) * c1] = m[p * b_graphs:(p + 1) * b_graphs, :]
    flat = flat_ref[...]                              # (B, 128)

    # conv2 as a Toeplitz matmul (padded positions have zero weight rows).
    y2 = jnp.maximum(
        jnp.dot(flat.astype(jnp.bfloat16), w2_ref[...].astype(jnp.bfloat16),
                preferred_element_type=jnp.float32) + b2_ref[...], 0.0)
    y3 = jnp.maximum(
        jnp.dot(y2.astype(jnp.bfloat16), w3_ref[...].astype(jnp.bfloat16),
                preferred_element_type=jnp.float32) + b3_ref[...], 0.0)
    # F.dropout(p=0.5) is the identity in inference mode (training=False).
    out_ref[...] = (jnp.dot(y3.astype(jnp.bfloat16),
                            w4_ref[...].astype(jnp.bfloat16),
                            preferred_element_type=jnp.float32) + b4_ref[...])


def dgcnn_head(p_even, p_odd, w1, b1, w2, b2, w3, b3, w4, b4, num_graphs):
    k_half = p_even.shape[0] // num_graphs
    c1 = w1.shape[1]
    args = (p_even, p_odd, w1, b1, w2, b2, w3, b3, w4, b4)
    return pl.pallas_call(
        dgcnn_head_kernel,
        out_shape=jax.ShapeDtypeStruct((num_graphs, 1), jnp.float32),
        grid=(1,),
        in_specs=[_full_spec(a) for a in args],
        out_specs=pl.BlockSpec((num_graphs, 1), lambda i: (0, 0)),
        scratch_shapes=[pltpu.VMEM((num_graphs, k_half * c1), jnp.float32)],
        compiler_params=_COMPILER_PARAMS,
    )(*args)


# ----------------------------------------------------------------------------
# Glue (plain JAX, jittable): adjacency normalization, sort pool, padding.
# ----------------------------------------------------------------------------
def build_gcn_adj(edge_index, num_nodes):
    """Dense A_hat = D^-1/2 (A + I) D^-1/2 matching torch_geometric gcn_norm."""
    src, dst = edge_index[0], edge_index[1]
    a = jnp.zeros((num_nodes, num_nodes), jnp.float32)
    a = a.at[dst, src].add(1.0)                       # A[i, j] = 1 iff edge j -> i
    a = a + jnp.eye(num_nodes, dtype=jnp.float32)     # add self loops
    deg = a.sum(axis=1)
    dinv = jnp.where(deg > 0, 1.0 / jnp.sqrt(deg), 0.0)
    return dinv[:, None] * a * dinv[None, :]


def global_sort_pool_pad(feat, score, num_graphs, k, k_pad, d_pad):
    """Sort nodes of each graph by the last channel (descending), keep top-k,
    then pad to a lane/sublane-aligned (B, k_pad, d_pad) tensor:
      columns [0:128] = hidden-layer features, column 128 = score, rest zeros.

    Demo assumes equal-size graphs laid out contiguously (batch = [0..0,1..1]).
    """
    # TODO(synk): sorting has no Pallas TPU primitive; done with jnp.argsort glue.
    n, d = feat.shape
    n_per = n // num_graphs
    featd = feat.reshape(num_graphs, n_per, d)
    scored = score.reshape(num_graphs, n_per)
    order = jnp.argsort(-scored, axis=1)
    featd = jnp.take_along_axis(featd, order[:, :, None], axis=1)
    scored = jnp.take_along_axis(scored, order, axis=1)
    if n_per >= k:
        featd, scored = featd[:, :k], scored[:, :k]
    else:
        featd = jnp.pad(featd, ((0, 0), (0, k - n_per), (0, 0)))
        scored = jnp.pad(scored, ((0, 0), (0, k - n_per)))
    pooled = jnp.zeros((num_graphs, k_pad, d_pad), jnp.float32)
    pooled = pooled.at[:, :k, :d].set(featd)
    pooled = pooled.at[:, :k, d].set(scored)
    return pooled                                     # (B, k_pad, d_pad)


def conv1d_toeplitz(w, b, in_len_real, n_pos_total):
    """Conv1d(C_in, C_out, K, stride=1) as one (pos*C_in)->(oc*L_out) matmul.

    Rows for padded positions (>= in_len_real) stay zero so the k_pad padding
    never reaches the output.  Host-side numpy; call from init_params only.
    """
    w = np.asarray(w, np.float32)
    b = np.asarray(b, np.float32)
    c_out, c_in, kk = w.shape
    l_out = in_len_real - kk + 1
    mat = np.zeros((n_pos_total * c_in, c_out * l_out), np.float32)
    for oc in range(c_out):
        for j in range(l_out):
            for t in range(kk):
                for ic in range(c_in):
                    mat[(j + t) * c_in + ic, oc * l_out + j] = w[oc, ic, t]
    bias = np.repeat(b, l_out)[None, :]
    return jnp.asarray(mat), jnp.asarray(bias)


# ----------------------------------------------------------------------------
# Parameters (raw torch-shaped + precomputed head matrices) + full forward
# ----------------------------------------------------------------------------
def init_params(key):
    c1, c2 = CONV1D_CHANNELS
    ks = jax.random.split(key, 16)
    s = lambda fan: 1.0 / np.sqrt(fan)
    # raw (torch-shaped) parameters
    emb = jax.random.normal(ks[0], (CONFIG['max_z'], H), jnp.float32) * 0.1
    ws = jax.random.normal(ks[1], (NL, H, H), jnp.float32) * s(H)
    bs = jax.random.normal(ks[2], (NL, 1, H), jnp.float32) * 0.01
    w_last = jax.random.normal(ks[3], (H, 1), jnp.float32) * s(H)
    b_last = jax.random.normal(ks[4], (1, 1), jnp.float32) * 0.01
    conv1_w = jax.random.normal(ks[5], (c1, 1, D_TOTAL), jnp.float32) * s(D_TOTAL)
    conv1_b = jax.random.normal(ks[6], (c1,), jnp.float32) * 0.01
    conv2_w = jax.random.normal(ks[7], (c2, c1, CONV2_K), jnp.float32) * s(c1 * CONV2_K)
    conv2_b = jax.random.normal(ks[8], (c2,), jnp.float32) * 0.01
    lin1_w = jax.random.normal(ks[9], (128, DENSE_DIM), jnp.float32) * s(DENSE_DIM)
    lin1_b = jax.random.normal(ks[10], (128,), jnp.float32) * 0.01
    lin2_w = jax.random.normal(ks[11], (1, 128), jnp.float32) * s(128)
    lin2_b = jax.random.normal(ks[12], (1,), jnp.float32) * 0.01

    # precomputed head matrices (done once here, not per forward call)
    w1 = np.zeros((D_PAD, c1), np.float32)
    w1[:D_TOTAL, :] = np.asarray(conv1_w).reshape(c1, D_TOTAL).T
    w2, b2 = conv1d_toeplitz(conv2_w, conv2_b, K // 2, K_PAD // 2)

    return dict(
        emb=emb, ws=ws, bs=bs, w_last=w_last, b_last=b_last,
        w1=jnp.asarray(w1), b1=conv1_b[None, :],
        w2=w2, b2=b2,
        w3=lin1_w.T, b3=lin1_b[None, :],
        w4=lin2_w.T, b4=lin2_b[None, :],
    )


def dgcnn_forward(params, z, edge_index, num_graphs):
    num_nodes = z.shape[0]
    a_hat = build_gcn_adj(edge_index, num_nodes)
    z_emb = params['emb'][z]                          # embedding gather (glue)

    # GCN stack (Pallas): lane-dense (N, 128) features + (N, 1) sort score
    feat, score = gcn_stack(a_hat, z_emb, params['ws'], params['bs'],
                            params['w_last'], params['b_last'])

    # global sort pooling + alignment padding (glue)
    pooled = global_sort_pool_pad(feat, score, num_graphs, K, K_PAD, D_PAD)

    # even/odd position planes, position-major rows (row = pos*B + graph)
    pooled_t = jnp.transpose(pooled, (1, 0, 2))       # (k_pad, B, D_PAD)
    p_even = pooled_t[0::2].reshape(-1, D_PAD)        # (k_pad/2 * B, D_PAD)
    p_odd = pooled_t[1::2].reshape(-1, D_PAD)

    # CNN / MLP head (Pallas, batched across graphs)
    return dgcnn_head(p_even, p_odd, params['w1'], params['b1'],
                      params['w2'], params['b2'], params['w3'], params['b3'],
                      params['w4'], params['b4'], num_graphs)      # (B, 1)


if __name__ == "__main__":
    key = jax.random.PRNGKey(0)
    params = init_params(key)

    # Two ring graphs of 12 nodes each (undirected -> both directed edges).
    n_per, num_graphs = 12, 2
    num_nodes = n_per * num_graphs
    src, dst = [], []
    for g in range(num_graphs):
        base = g * n_per
        for i in range(n_per):
            a_, b_ = base + i, base + (i + 1) % n_per
            src += [a_, b_]
            dst += [b_, a_]
    edge_index = jnp.array([src, dst], dtype=jnp.int32)          # (2, 48)
    z = jax.random.randint(jax.random.PRNGKey(1), (num_nodes,), 0,
                           CONFIG['max_z'], dtype=jnp.int32)

    fwd = jax.jit(dgcnn_forward, static_argnames=('num_graphs',))
    out = fwd(params, z, edge_index, num_graphs=num_graphs)
    out = jax.block_until_ready(out)
    assert out.shape == (num_graphs, 1) and out.dtype == jnp.float32
    assert bool(jnp.all(jnp.isfinite(out)))
    print("KERNEL_OK")
</pallas_src>

<mosaic_0001>
module attributes {stable_mosaic.version = 11 : i64} {
  func.func private @main(%arg0: i32) attributes {dimension_semantics = [#tpu.dimension_semantics<core_parallel>], iteration_bounds = array<i64: 2>, tpu.core_type = #tpu.core_type<sc_scalar_subcore>, window_params = []} {
    return
  }
}

module attributes {stable_mosaic.version = 11 : i64} {
  func.func private @main(%arg0: i32) attributes {dimension_semantics = [#tpu.dimension_semantics<core_parallel>], iteration_bounds = array<i64: 2>, tpu.core_type = #tpu.core_type<sc_scalar_subcore>, window_params = []} {
    return
  }
}

module attributes {stable_mosaic.version = 11 : i64} {
  func.func @gcn_stack_kernel(%arg0: i32, %arg1: memref<24x24xf32, #tpu.memory_space<vmem>>, %arg2: memref<24x32xf32, #tpu.memory_space<vmem>>, %arg3: memref<4x32x32xf32, #tpu.memory_space<vmem>>, %arg4: memref<4x1x32xf32, #tpu.memory_space<vmem>>, %arg5: memref<32x1xf32, #tpu.memory_space<vmem>>, %arg6: memref<1x1xf32, #tpu.memory_space<vmem>>, %arg7: memref<24x128xf32, #tpu.memory_space<vmem>>, %arg8: memref<24x1xf32, #tpu.memory_space<vmem>>) attributes {dimension_semantics = [#tpu.dimension_semantics<arbitrary>], iteration_bounds = array<i64: 1>, scalar_prefetch = 0 : i64, scratch_operands = 0 : i64, tpu.core_type = #tpu.core_type<tc>, window_params = [{pipeline_mode = #tpu.pipeline_mode<synchronous>, transform_indices = @transform_0, window_bounds = array<i64: 24, 24>}, {pipeline_mode = #tpu.pipeline_mode<synchronous>, transform_indices = @transform_1, window_bounds = array<i64: 24, 32>}, {pipeline_mode = #tpu.pipeline_mode<synchronous>, transform_indices = @transform_2, window_bounds = array<i64: 4, 32, 32>}, {pipeline_mode = #tpu.pipeline_mode<synchronous>, transform_indices = @transform_3, window_bounds = array<i64: 4, 1, 32>}, {pipeline_mode = #tpu.pipeline_mode<synchronous>, transform_indices = @transform_4, window_bounds = array<i64: 32, 1>}, {pipeline_mode = #tpu.pipeline_mode<synchronous>, transform_indices = @transform_5, window_bounds = array<i64: 1, 1>}, {pipeline_mode = #tpu.pipeline_mode<synchronous>, transform_indices = @transform_6, window_bounds = array<i64: 24, 128>}, {pipeline_mode = #tpu.pipeline_mode<synchronous>, transform_indices = @transform_7, window_bounds = array<i64: 24, 1>}]} {
    %c0 = arith.constant 0 : index
    %c0_0 = arith.constant 0 : index
    %0 = vector.load %arg1[%c0, %c0_0] : memref<24x24xf32, #tpu.memory_space<vmem>>, vector<24x24xf32>
    %1 = arith.truncf %0 : vector<24x24xf32> to vector<24x24xbf16>
    %c0_1 = arith.constant 0 : index
    %c0_2 = arith.constant 0 : index
    %2 = vector.load %arg2[%c0_1, %c0_2] : memref<24x32xf32, #tpu.memory_space<vmem>>, vector<24x32xf32>
    %c0_3 = arith.constant 0 : index
    %c0_4 = arith.constant 0 : index
    %c0_5 = arith.constant 0 : index
    %3 = vector.load %arg3[%c0_3, %c0_4, %c0_5] : memref<4x32x32xf32, #tpu.memory_space<vmem>>, vector<1x32x32xf32>
    %4 = vector.shape_cast %3 : vector<1x32x32xf32> to vector<32x32xf32>
    %5 = arith.truncf %4 : vector<32x32xf32> to vector<32x32xbf16>
    %6 = arith.truncf %2 : vector<24x32xf32> to vector<24x32xbf16>
    %cst = arith.constant dense<0.000000e+00> : vector<24x32xf32>
    %7 = tpu.matmul %6, %5, %cst {dimension_numbers = #tpu.dot_dimension_numbers<[1], [0], [0], [1], [0, 0, 1, 1], [], []>} : vector<24x32xbf16>, vector<32x32xbf16>, vector<24x32xf32> -> vector<24x32xf32>
    %8 = arith.truncf %7 : vector<24x32xf32> to vector<24x32xbf16>
    %cst_6 = arith.constant dense<0.000000e+00> : vector<24x32xf32>
    %9 = tpu.matmul %1, %8, %cst_6 {dimension_numbers = #tpu.dot_dimension_numbers<[1], [0], [0], [1], [0, 0, 1, 1], [], []>} : vector<24x24xbf16>, vector<24x32xbf16>, vector<24x32xf32> -> vector<24x32xf32>
    %c0_7 = arith.constant 0 : index
    %c0_8 = arith.constant 0 : index
    %c0_9 = arith.constant 0 : index
    %10 = vector.load %arg4[%c0_7, %c0_8, %c0_9] : memref<4x1x32xf32, #tpu.memory_space<vmem>>, vector<1x1x32xf32>
    %11 = vector.shape_cast %10 : vector<1x1x32xf32> to vector<1x32xf32>
    %12 = vector.broadcast %11 : vector<1x32xf32> to vector<24x32xf32>
    %13 = arith.addf %9, %12 : vector<24x32xf32>
    %14 = math.tanh %13 : vector<24x32xf32>
    %c0_10 = arith.constant 0 : index
    %c0_11 = arith.constant 0 : index
    %15 = vector.load %arg7[%c0_10, %c0_11] : memref<24x128xf32, #tpu.memory_space<vmem>>, vector<24x32xf32>
    tpu.vector_store %arg7[%c0_10, %c0_11], %14 {strides = array<i32>} : memref<24x128xf32, #tpu.memory_space<vmem>>, vector<24x32xf32>,
    %c1 = arith.constant 1 : index
    %c0_12 = arith.constant 0 : index
    %c0_13 = arith.constant 0 : index
    %16 = vector.load %arg3[%c1, %c0_12, %c0_13] : memref<4x32x32xf32, #tpu.memory_space<vmem>>, vector<1x32x32xf32>
    %17 = vector.shape_cast %16 : vector<1x32x32xf32> to vector<32x32xf32>
    %18 = arith.truncf %17 : vector<32x32xf32> to vector<32x32xbf16>
    %19 = arith.truncf %14 : vector<24x32xf32> to vector<24x32xbf16>
    %cst_14 = arith.constant dense<0.000000e+00> : vector<24x32xf32>
    %20 = tpu.matmul %19, %18, %cst_14 {dimension_numbers = #tpu.dot_dimension_numbers<[1], [0], [0], [1], [0, 0, 1, 1], [], []>} : vector<24x32xbf16>, vector<32x32xbf16>, vector<24x32xf32> -> vector<24x32xf32>
    %21 = arith.truncf %20 : vector<24x32xf32> to vector<24x32xbf16>
    %cst_15 = arith.constant dense<0.000000e+00> : vector<24x32xf32>
    %22 = tpu.matmul %1, %21, %cst_15 {dimension_numbers = #tpu.dot_dimension_numbers<[1], [0], [0], [1], [0, 0, 1, 1], [], []>} : vector<24x24xbf16>, vector<24x32xbf16>, vector<24x32xf32> -> vector<24x32xf32>
    %c1_16 = arith.constant 1 : index
    %c0_17 = arith.constant 0 : index
    %c0_18 = arith.constant 0 : index
    %23 = vector.load %arg4[%c1_16, %c0_17, %c0_18] : memref<4x1x32xf32, #tpu.memory_space<vmem>>, vector<1x1x32xf32>
    %24 = vector.shape_cast %23 : vector<1x1x32xf32> to vector<1x32xf32>
    %25 = vector.broadcast %24 : vector<1x32xf32> to vector<24x32xf32>
    %26 = arith.addf %22, %25 : vector<24x32xf32>
    %27 = math.tanh %26 : vector<24x32xf32>
    %c0_19 = arith.constant 0 : index
    %c32 = arith.constant 32 : index
    %28 = vector.load %arg7[%c0_19, %c32] : memref<24x128xf32, #tpu.memory_space<vmem>>, vector<24x32xf32>
    tpu.vector_store %arg7[%c0_19, %c32], %27 {strides = array<i32>} : memref<24x128xf32, #tpu.memory_space<vmem>>, vector<24x32xf32>,
    %c2 = arith.constant 2 : index
    %c0_20 = arith.constant 0 : index
    %c0_21 = arith.constant 0 : index
    %29 = vector.load %arg3[%c2, %c0_20, %c0_21] : memref<4x32x32xf32, #tpu.memory_space<vmem>>, vector<1x32x32xf32>
    %30 = vector.shape_cast %29 : vector<1x32x32xf32> to vector<32x32xf32>
    %31 = arith.truncf %30 : vector<32x32xf32> to vector<32x32xbf16>
    %32 = arith.truncf %27 : vector<24x32xf32> to vector<24x32xbf16>
    %cst_22 = arith.constant dense<0.000000e+00> : vector<24x32xf32>
    %33 = tpu.matmul %32, %31, %cst_22 {dimension_numbers = #tpu.dot_dimension_numbers<[1], [0], [0], [1], [0, 0, 1, 1], [], []>} : vector<24x32xbf16>, vector<32x32xbf16>, vector<24x32xf32> -> vector<24x32xf32>
    %34 = arith.truncf %33 : vector<24x32xf32> to vector<24x32xbf16>
    %cst_23 = arith.constant dense<0.000000e+00> : vector<24x32xf32>
    %35 = tpu.matmul %1, %34, %cst_23 {dimension_numbers = #tpu.dot_dimension_numbers<[1], [0], [0], [1], [0, 0, 1, 1], [], []>} : vector<24x24xbf16>, vector<24x32xbf16>, vector<24x32xf32> -> vector<24x32xf32>
    %c2_24 = arith.constant 2 : index
    %c0_25 = arith.constant 0 : index
    %c0_26 = arith.constant 0 : index
    %36 = vector.load %arg4[%c2_24, %c0_25, %c0_26] : memref<4x1x32xf32, #tpu.memory_space<vmem>>, vector<1x1x32xf32>
    %37 = vector.shape_cast %36 : vector<1x1x32xf32> to vector<1x32xf32>
    %38 = vector.broadcast %37 : vector<1x32xf32> to vector<24x32xf32>
    %39 = arith.addf %35, %38 : vector<24x32xf32>
    %40 = math.tanh %39 : vector<24x32xf32>
    %c0_27 = arith.constant 0 : index
    %c64 = arith.constant 64 : index
    %41 = vector.load %arg7[%c0_27, %c64] : memref<24x128xf32, #tpu.memory_space<vmem>>, vector<24x32xf32>
    tpu.vector_store %arg7[%c0_27, %c64], %40 {strides = array<i32>} : memref<24x128xf32, #tpu.memory_space<vmem>>, vector<24x32xf32>,
    %c3 = arith.constant 3 : index
    %c0_28 = arith.constant 0 : index
    %c0_29 = arith.constant 0 : index
    %42 = vector.load %arg3[%c3, %c0_28, %c0_29] : memref<4x32x32xf32, #tpu.memory_space<vmem>>, vector<1x32x32xf32>
    %43 = vector.shape_cast %42 : vector<1x32x32xf32> to vector<32x32xf32>
    %44 = arith.truncf %43 : vector<32x32xf32> to vector<32x32xbf16>
    %45 = arith.truncf %40 : vector<24x32xf32> to vector<24x32xbf16>
    %cst_30 = arith.constant dense<0.000000e+00> : vector<24x32xf32>
    %46 = tpu.matmul %45, %44, %cst_30 {dimension_numbers = #tpu.dot_dimension_numbers<[1], [0], [0], [1], [0, 0, 1, 1], [], []>} : vector<24x32xbf16>, vector<32x32xbf16>, vector<24x32xf32> -> vector<24x32xf32>
    %47 = arith.truncf %46 : vector<24x32xf32> to vector<24x32xbf16>
    %cst_31 = arith.constant dense<0.000000e+00> : vector<24x32xf32>
    %48 = tpu.matmul %1, %47, %cst_31 {dimension_numbers = #tpu.dot_dimension_numbers<[1], [0], [0], [1], [0, 0, 1, 1], [], []>} : vector<24x24xbf16>, vector<24x32xbf16>, vector<24x32xf32> -> vector<24x32xf32>
    %c3_32 = arith.constant 3 : index
    %c0_33 = arith.constant 0 : index
    %c0_34 = arith.constant 0 : index
    %49 = vector.load %arg4[%c3_32, %c0_33, %c0_34] : memref<4x1x32xf32, #tpu.memory_space<vmem>>, vector<1x1x32xf32>
    %50 = vector.shape_cast %49 : vector<1x1x32xf32> to vector<1x32xf32>
    %51 = vector.broadcast %50 : vector<1x32xf32> to vector<24x32xf32>
    %52 = arith.addf %48, %51 : vector<24x32xf32>
    %53 = math.tanh %52 : vector<24x32xf32>
    %c0_35 = arith.constant 0 : index
    %c96 = arith.constant 96 : index
    %54 = vector.load %arg7[%c0_35, %c96] : memref<24x128xf32, #tpu.memory_space<vmem>>, vector<24x32xf32>
    tpu.vector_store %arg7[%c0_35, %c96], %53 {strides = array<i32>} : memref<24x128xf32, #tpu.memory_space<vmem>>, vector<24x32xf32>,
    %55 = arith.truncf %53 : vector<24x32xf32> to vector<24x32xbf16>
    %c0_36 = arith.constant 0 : index
    %c0_37 = arith.constant 0 : index
    %56 = vector.load %arg5[%c0_36, %c0_37] : memref<32x1xf32, #tpu.memory_space<vmem>>, vector<32x1xf32>
    %57 = arith.truncf %56 : vector<32x1xf32> to vector<32x1xbf16>
    %cst_38 = arith.constant dense<0.000000e+00> : vector<24x1xf32>
    %58 = tpu.matmul %55, %57, %cst_38 {dimension_numbers = #tpu.dot_dimension_numbers<[1], [0], [0], [1], [0, 0, 1, 1], [], []>} : vector<24x32xbf16>, vector<32x1xbf16>, vector<24x1xf32> -> vector<24x1xf32>
    %59 = arith.truncf %58 : vector<24x1xf32> to vector<24x1xbf16>
    %cst_39 = arith.constant dense<0.000000e+00> : vector<24x1xf32>
    %60 = tpu.matmul %1, %59, %cst_39 {dimension_numbers = #tpu.dot_dimension_numbers<[1], [0], [0], [1], [0, 0, 1, 1], [], []>} : vector<24x24xbf16>, vector<24x1xbf16>, vector<24x1xf32> -> vector<24x1xf32>
    %c0_40 = arith.constant 0 : index
    %c0_41 = arith.constant 0 : index
    %61 = vector.load %arg6[%c0_40, %c0_41] : memref<1x1xf32, #tpu.memory_space<vmem>>, vector<1x1xf32>
    %62 = vector.broadcast %61 : vector<1x1xf32> to vector<24x1xf32>
    %63 = arith.addf %60, %62 : vector<24x1xf32>
    %64 = math.tanh %63 : vector<24x1xf32>
    %c0_42 = arith.constant 0 : index
    %c0_43 = arith.constant 0 : index
    %65 = vector.load %arg8[%c0_42, %c0_43] : memref<24x1xf32, #tpu.memory_space<vmem>>, vector<24x1xf32>
    tpu.vector_store %arg8[%c0_42, %c0_43], %64 {strides = array<i32>} : memref<24x1xf32, #tpu.memory_space<vmem>>, vector<24x1xf32>,
    return
  }
  func.func @transform_0(%arg0: i32) -> (i32, i32) {
    %c0_i32 = arith.constant 0 : i32
    %c0_i32_0 = arith.constant 0 : i32
    %c0_i32_1 = arith.constant 0 : i32
    return %c0_i32, %c0_i32_0 : i32, i32
  }
  func.func @transform_1(%arg0: i32) -> (i32, i32) {
    %c0_i32 = arith.constant 0 : i32
    %c0_i32_0 = arith.constant 0 : i32
    %c0_i32_1 = arith.constant 0 : i32
    return %c0_i32, %c0_i32_0 : i32, i32
  }
  func.func @transform_2(%arg0: i32) -> (i32, i32, i32) {
    %c0_i32 = arith.constant 0 : i32
    %c0_i32_0 = arith.constant 0 : i32
    %c0_i32_1 = arith.constant 0 : i32
    %c0_i32_2 = arith.constant 0 : i32
    return %c0_i32, %c0_i32_0, %c0_i32_1 : i32, i32, i32
  }
  func.func @transform_3(%arg0: i32) -> (i32, i32, i32) {
    %c0_i32 = arith.constant 0 : i32
    %c0_i32_0 = arith.constant 0 : i32
    %c0_i32_1 = arith.constant 0 : i32
    %c0_i32_2 = arith.constant 0 : i32
    return %c0_i32, %c0_i32_0, %c0_i32_1 : i32, i32, i32
  }
  func.func @transform_4(%arg0: i32) -> (i32, i32) {
    %c0_i32 = arith.constant 0 : i32
    %c0_i32_0 = arith.constant 0 : i32
    %c0_i32_1 = arith.constant 0 : i32
    return %c0_i32, %c0_i32_0 : i32, i32
  }
  func.func @transform_5(%arg0: i32) -> (i32, i32) {
    %c0_i32 = arith.constant 0 : i32
    %c0_i32_0 = arith.constant 0 : i32
    %c0_i32_1 = arith.constant 0 : i32
    return %c0_i32, %c0_i32_0 : i32, i32
  }
  func.func @transform_6(%arg0: i32) -> (i32, i32) {
    %c0_i32 = arith.constant 0 : i32
    %c0_i32_0 = arith.constant 0 : i32
    %c0_i32_1 = arith.constant 0 : i32
    return %c0_i32, %c0_i32_0 : i32, i32
  }
  func.func @transform_7(%arg0: i32) -> (i32, i32) {
    %c0_i32 = arith.constant 0 : i32
    %c0_i32_0 = arith.constant 0 : i32
    %c0_i32_1 = arith.constant 0 : i32
    return %c0_i32, %c0_i32_0 : i32, i32
  }
}

module attributes {stable_mosaic.version = 11 : i64} {
  func.func @dgcnn_head_kernel(%arg0: i32, %arg1: memref<16x256xf32, #tpu.memory_space<vmem>>, %arg2: memref<16x256xf32, #tpu.memory_space<vmem>>, %arg3: memref<256x16xf32, #tpu.memory_space<vmem>>, %arg4: memref<1x16xf32, #tpu.memory_space<vmem>>, %arg5: memref<128x32xf32, #tpu.memory_space<vmem>>, %arg6: memref<1x32xf32, #tpu.memory_space<vmem>>, %arg7: memref<32x128xf32, #tpu.memory_space<vmem>>, %arg8: memref<1x128xf32, #tpu.memory_space<vmem>>, %arg9: memref<128x1xf32, #tpu.memory_space<vmem>>, %arg10: memref<1x1xf32, #tpu.memory_space<vmem>>, %arg11: memref<2x1xf32, #tpu.memory_space<vmem>>, %arg12: memref<2x128xf32, #tpu.memory_space<vmem>>) attributes {dimension_semantics = [#tpu.dimension_semantics<arbitrary>], iteration_bounds = array<i64: 1>, scalar_prefetch = 0 : i64, scratch_operands = 1 : i64, tpu.core_type = #tpu.core_type<tc>, window_params = [{pipeline_mode = #tpu.pipeline_mode<synchronous>, transform_indices = @transform_0, window_bounds = array<i64: 16, 256>}, {pipeline_mode = #tpu.pipeline_mode<synchronous>, transform_indices = @transform_1, window_bounds = array<i64: 16, 256>}, {pipeline_mode = #tpu.pipeline_mode<synchronous>, transform_indices = @transform_2, window_bounds = array<i64: 256, 16>}, {pipeline_mode = #tpu.pipeline_mode<synchronous>, transform_indices = @transform_3, window_bounds = array<i64: 1, 16>}, {pipeline_mode = #tpu.pipeline_mode<synchronous>, transform_indices = @transform_4, window_bounds = array<i64: 128, 32>}, {pipeline_mode = #tpu.pipeline_mode<synchronous>, transform_indices = @transform_5, window_bounds = array<i64: 1, 32>}, {pipeline_mode = #tpu.pipeline_mode<synchronous>, transform_indices = @transform_6, window_bounds = array<i64: 32, 128>}, {pipeline_mode = #tpu.pipeline_mode<synchronous>, transform_indices = @transform_7, window_bounds = array<i64: 1, 128>}, {pipeline_mode = #tpu.pipeline_mode<synchronous>, transform_indices = @transform_8, window_bounds = array<i64: 128, 1>}, {pipeline_mode = #tpu.pipeline_mode<synchronous>, transform_indices = @transform_9, window_bounds = array<i64: 1, 1>}, {pipeline_mode = #tpu.pipeline_mode<synchronous>, transform_indices = @transform_10, window_bounds = array<i64: 2, 1>}]} {
    %c0 = arith.constant 0 : index
    %c0_0 = arith.constant 0 : index
    %0 = vector.load %arg3[%c0, %c0_0] : memref<256x16xf32, #tpu.memory_space<vmem>>, vector<256x16xf32>
    %1 = arith.truncf %0 : vector<256x16xf32> to vector<256x16xbf16>
    %c0_1 = arith.constant 0 : index
    %c0_2 = arith.constant 0 : index
    %2 = vector.load %arg1[%c0_1, %c0_2] : memref<16x256xf32, #tpu.memory_space<vmem>>, vector<16x256xf32>
    %3 = arith.truncf %2 : vector<16x256xf32> to vector<16x256xbf16>
    %cst = arith.constant dense<0.000000e+00> : vector<16x16xf32>
    %4 = tpu.matmul %3, %1, %cst {dimension_numbers = #tpu.dot_dimension_numbers<[1], [0], [0], [1], [0, 0, 1, 1], [], []>} : vector<16x256xbf16>, vector<256x16xbf16>, vector<16x16xf32> -> vector<16x16xf32>
    %c0_3 = arith.constant 0 : index
    %c0_4 = arith.constant 0 : index
    %5 = vector.load %arg4[%c0_3, %c0_4] : memref<1x16xf32, #tpu.memory_space<vmem>>, vector<1x16xf32>
    %6 = vector.broadcast %5 : vector<1x16xf32> to vector<16x16xf32>
    %7 = arith.addf %4, %6 : vector<16x16xf32>
    %cst_5 = arith.constant 0.000000e+00 : f32
    %8 = vector.broadcast %cst_5 : f32 to vector<16x16xf32>
    %9 = arith.maximumf %7, %8 : vector<16x16xf32>
    %c0_6 = arith.constant 0 : index
    %c0_7 = arith.constant 0 : index
    %10 = vector.load %arg2[%c0_6, %c0_7] : memref<16x256xf32, #tpu.memory_space<vmem>>, vector<16x256xf32>
    %11 = arith.truncf %10 : vector<16x256xf32> to vector<16x256xbf16>
    %cst_8 = arith.constant dense<0.000000e+00> : vector<16x16xf32>
    %12 = tpu.matmul %11, %1, %cst_8 {dimension_numbers = #tpu.dot_dimension_numbers<[1], [0], [0], [1], [0, 0, 1, 1], [], []>} : vector<16x256xbf16>, vector<256x16xbf16>, vector<16x16xf32> -> vector<16x16xf32>
    %c0_9 = arith.constant 0 : index
    %c0_10 = arith.constant 0 : index
    %13 = vector.load %arg4[%c0_9, %c0_10] : memref<1x16xf32, #tpu.memory_space<vmem>>, vector<1x16xf32>
    %14 = vector.broadcast %13 : vector<1x16xf32> to vector<16x16xf32>
    %15 = arith.addf %12, %14 : vector<16x16xf32>
    %cst_11 = arith.constant 0.000000e+00 : f32
    %16 = vector.broadcast %cst_11 : f32 to vector<16x16xf32>
    %17 = arith.maximumf %15, %16 : vector<16x16xf32>
    %18 = arith.maximumf %9, %17 : vector<16x16xf32>
    %19 = vector.extract_strided_slice %18 {offsets = [0, 0], sizes = [2, 16], strides = [1, 1]} : vector<16x16xf32> to vector<2x16xf32>
    %c0_12 = arith.constant 0 : index
    %c0_13 = arith.constant 0 : index
    %20 = vector.load %arg12[%c0_12, %c0_13] : memref<2x128xf32, #tpu.memory_space<vmem>>, vector<2x16xf32>
    tpu.vector_store %arg12[%c0_12, %c0_13], %19 {strides = array<i32>} : memref<2x128xf32, #tpu.memory_space<vmem>>, vector<2x16xf32>,
    %21 = vector.extract_strided_slice %18 {offsets = [2, 0], sizes = [2, 16], strides = [1, 1]} : vector<16x16xf32> to vector<2x16xf32>
    %c0_14 = arith.constant 0 : index
    %c16 = arith.constant 16 : index
    %22 = vector.load %arg12[%c0_14, %c16] : memref<2x128xf32, #tpu.memory_space<vmem>>, vector<2x16xf32>
    tpu.vector_store %arg12[%c0_14, %c16], %21 {strides = array<i32>} : memref<2x128xf32, #tpu.memory_space<vmem>>, vector<2x16xf32>,
    %23 = vector.extract_strided_slice %18 {offsets = [4, 0], sizes = [2, 16], strides = [1, 1]} : vector<16x16xf32> to vector<2x16xf32>
    %c0_15 = arith.constant 0 : index
    %c32 = arith.constant 32 : index
    %24 = vector.load %arg12[%c0_15, %c32] : memref<2x128xf32, #tpu.memory_space<vmem>>, vector<2x16xf32>
    tpu.vector_store %arg12[%c0_15, %c32], %23 {strides = array<i32>} : memref<2x128xf32, #tpu.memory_space<vmem>>, vector<2x16xf32>,
    %25 = vector.extract_strided_slice %18 {offsets = [6, 0], sizes = [2, 16], strides = [1, 1]} : vector<16x16xf32> to vector<2x16xf32>
    %c0_16 = arith.constant 0 : index
    %c48 = arith.constant 48 : index
    %26 = vector.load %arg12[%c0_16, %c48] : memref<2x128xf32, #tpu.memory_space<vmem>>, vector<2x16xf32>
    tpu.vector_store %arg12[%c0_16, %c48], %25 {strides = array<i32>} : memref<2x128xf32, #tpu.memory_space<vmem>>, vector<2x16xf32>,
    %27 = vector.extract_strided_slice %18 {offsets = [8, 0], sizes = [2, 16], strides = [1, 1]} : vector<16x16xf32> to vector<2x16xf32>
    %c0_17 = arith.constant 0 : index
    %c64 = arith.constant 64 : index
    %28 = vector.load %arg12[%c0_17, %c64] : memref<2x128xf32, #tpu.memory_space<vmem>>, vector<2x16xf32>
    tpu.vector_store %arg12[%c0_17, %c64], %27 {strides = array<i32>} : memref<2x128xf32, #tpu.memory_space<vmem>>, vector<2x16xf32>,
    %29 = vector.extract_strided_slice %18 {offsets = [10, 0], sizes = [2, 16], strides = [1, 1]} : vector<16x16xf32> to vector<2x16xf32>
    %c0_18 = arith.constant 0 : index
    %c80 = arith.constant 80 : index
    %30 = vector.load %arg12[%c0_18, %c80] : memref<2x128xf32, #tpu.memory_space<vmem>>, vector<2x16xf32>
    tpu.vector_store %arg12[%c0_18, %c80], %29 {strides = array<i32>} : memref<2x128xf32, #tpu.memory_space<vmem>>, vector<2x16xf32>,
    %31 = vector.extract_strided_slice %18 {offsets = [12, 0], sizes = [2, 16], strides = [1, 1]} : vector<16x16xf32> to vector<2x16xf32>
    %c0_19 = arith.constant 0 : index
    %c96 = arith.constant 96 : index
    %32 = vector.load %arg12[%c0_19, %c96] : memref<2x128xf32, #tpu.memory_space<vmem>>, vector<2x16xf32>
    tpu.vector_store %arg12[%c0_19, %c96], %31 {strides = array<i32>} : memref<2x128xf32, #tpu.memory_space<vmem>>, vector<2x16xf32>,
    %33 = vector.extract_strided_slice %18 {offsets = [14, 0], sizes = [2, 16], strides = [1, 1]} : vector<16x16xf32> to vector<2x16xf32>
    %c0_20 = arith.constant 0 : index
    %c112 = arith.constant 112 : index
    %34 = vector.load %arg12[%c0_20, %c112] : memref<2x128xf32, #tpu.memory_space<vmem>>, vector<2x16xf32>
    tpu.vector_store %arg12[%c0_20, %c112], %33 {strides = array<i32>} : memref<2x128xf32, #tpu.memory_space<vmem>>, vector<2x16xf32>,
    %c0_21 = arith.constant 0 : index
    %c0_22 = arith.constant 0 : index
    %35 = vector.load %arg12[%c0_21, %c0_22] : memref<2x128xf32, #tpu.memory_space<vmem>>, vector<2x128xf32>
    %36 = arith.truncf %35 : vector<2x128xf32> to vector<2x128xbf16>
    %c0_23 = arith.constant 0 : index
    %c0_24 = arith.constant 0 : index
    %37 = vector.load %arg5[%c0_23, %c0_24] : memref<128x32xf32, #tpu.memory_space<vmem>>, vector<128x32xf32>
    %38 = arith.truncf %37 : vector<128x32xf32> to vector<128x32xbf16>
    %cst_25 = arith.constant dense<0.000000e+00> : vector<2x32xf32>
    %39 = tpu.matmul %36, %38, %cst_25 {dimension_numbers = #tpu.dot_dimension_numbers<[1], [0], [0], [1], [0, 0, 1, 1], [], []>} : vector<2x128xbf16>, vector<128x32xbf16>, vector<2x32xf32> -> vector<2x32xf32>
    %c0_26 = arith.constant 0 : index
    %c0_27 = arith.constant 0 : index
    %40 = vector.load %arg6[%c0_26, %c0_27] : memref<1x32xf32, #tpu.memory_space<vmem>>, vector<1x32xf32>
    %41 = vector.broadcast %40 : vector<1x32xf32> to vector<2x32xf32>
    %42 = arith.addf %39, %41 : vector<2x32xf32>
    %cst_28 = arith.constant 0.000000e+00 : f32
    %43 = vector.broadcast %cst_28 : f32 to vector<2x32xf32>
    %44 = arith.maximumf %42, %43 : vector<2x32xf32>
    %45 = arith.truncf %44 : vector<2x32xf32> to vector<2x32xbf16>
    %c0_29 = arith.constant 0 : index
    %c0_30 = arith.constant 0 : index
    %46 = vector.load %arg7[%c0_29, %c0_30] : memref<32x128xf32, #tpu.memory_space<vmem>>, vector<32x128xf32>
    %47 = arith.truncf %46 : vector<32x128xf32> to vector<32x128xbf16>
    %cst_31 = arith.constant dense<0.000000e+00> : vector<2x128xf32>
    %48 = tpu.matmul %45, %47, %cst_31 {dimension_numbers = #tpu.dot_dimension_numbers<[1], [0], [0], [1], [0, 0, 1, 1], [], []>} : vector<2x32xbf16>, vector<32x128xbf16>, vector<2x128xf32> -> vector<2x128xf32>
    %c0_32 = arith.constant 0 : index
    %c0_33 = arith.constant 0 : index
    %49 = vector.load %arg8[%c0_32, %c0_33] : memref<1x128xf32, #tpu.memory_space<vmem>>, vector<1x128xf32>
    %50 = vector.broadcast %49 : vector<1x128xf32> to vector<2x128xf32>
    %51 = arith.addf %48, %50 : vector<2x128xf32>
    %cst_34 = arith.constant 0.000000e+00 : f32
    %52 = vector.broadcast %cst_34 : f32 to vector<2x128xf32>
    %53 = arith.maximumf %51, %52 : vector<2x128xf32>
    %54 = arith.truncf %53 : vector<2x128xf32> to vector<2x128xbf16>
    %c0_35 = arith.constant 0 : index
    %c0_36 = arith.constant 0 : index
    %55 = vector.load %arg9[%c0_35, %c0_36] : memref<128x1xf32, #tpu.memory_space<vmem>>, vector<128x1xf32>
    %56 = arith.truncf %55 : vector<128x1xf32> to vector<128x1xbf16>
    %cst_37 = arith.constant dense<0.000000e+00> : vector<2x1xf32>
    %57 = tpu.matmul %54, %56, %cst_37 {dimension_numbers = #tpu.dot_dimension_numbers<[1], [0], [0], [1], [0, 0, 1, 1], [], []>} : vector<2x128xbf16>, vector<128x1xbf16>, vector<2x1xf32> -> vector<2x1xf32>
    %c0_38 = arith.constant 0 : index
    %c0_39 = arith.constant 0 : index
    %58 = vector.load %arg10[%c0_38, %c0_39] : memref<1x1xf32, #tpu.memory_space<vmem>>, vector<1x1xf32>
    %59 = vector.broadcast %58 : vector<1x1xf32> to vector<2x1xf32>
    %60 = arith.addf %57, %59 : vector<2x1xf32>
    %c0_40 = arith.constant 0 : index
    %c0_41 = arith.constant 0 : index
    %61 = vector.load %arg11[%c0_40, %c0_41] : memref<2x1xf32, #tpu.memory_space<vmem>>, vector<2x1xf32>
    tpu.vector_store %arg11[%c0_40, %c0_41], %60 {strides = array<i32>} : memref<2x1xf32, #tpu.memory_space<vmem>>, vector<2x1xf32>,
    return
  }
  func.func @transform_0(%arg0: i32) -> (i32, i32) {
    %c0_i32 = arith.constant 0 : i32
    %c0_i32_0 = arith.constant 0 : i32
    %c0_i32_1 = arith.constant 0 : i32
    return %c0_i32, %c0_i32_0 : i32, i32
  }
  func.func @transform_1(%arg0: i32) -> (i32, i32) {
    %c0_i32 = arith.constant 0 : i32
    %c0_i32_0 = arith.constant 0 : i32
    %c0_i32_1 = arith.constant 0 : i32
    return %c0_i32, %c0_i32_0 : i32, i32
  }
  func.func @transform_2(%arg0: i32) -> (i32, i32) {
    %c0_i32 = arith.constant 0 : i32
    %c0_i32_0 = arith.constant 0 : i32
    %c0_i32_1 = arith.constant 0 : i32
    return %c0_i32, %c0_i32_0 : i32, i32
  }
  func.func @transform_3(%arg0: i32) -> (i32, i32) {
    %c0_i32 = arith.constant 0 : i32
    %c0_i32_0 = arith.constant 0 : i32
    %c0_i32_1 = arith.constant 0 : i32
    return %c0_i32, %c0_i32_0 : i32, i32
  }
  func.func @transform_4(%arg0: i32) -> (i32, i32) {
    %c0_i32 = arith.constant 0 : i32
    %c0_i32_0 = arith.constant 0 : i32
    %c0_i32_1 = arith.constant 0 : i32
    return %c0_i32, %c0_i32_0 : i32, i32
  }
  func.func @transform_5(%arg0: i32) -> (i32, i32) {
    %c0_i32 = arith.constant 0 : i32
    %c0_i32_0 = arith.constant 0 : i32
    %c0_i32_1 = arith.constant 0 : i32
    return %c0_i32, %c0_i32_0 : i32, i32
  }
  func.func @transform_6(%arg0: i32) -> (i32, i32) {
    %c0_i32 = arith.constant 0 : i32
    %c0_i32_0 = arith.constant 0 : i32
    %c0_i32_1 = arith.constant 0 : i32
    return %c0_i32, %c0_i32_0 : i32, i32
  }
  func.func @transform_7(%arg0: i32) -> (i32, i32) {
    %c0_i32 = arith.constant 0 : i32
    %c0_i32_0 = arith.constant 0 : i32
    %c0_i32_1 = arith.constant 0 : i32
    return %c0_i32, %c0_i32_0 : i32, i32
  }
  func.func @transform_8(%arg0: i32) -> (i32, i32) {
    %c0_i32 = arith.constant 0 : i32
    %c0_i32_0 = arith.constant 0 : i32
    %c0_i32_1 = arith.constant 0 : i32
    return %c0_i32, %c0_i32_0 : i32, i32
  }
  func.func @transform_9(%arg0: i32) -> (i32, i32) {
    %c0_i32 = arith.constant 0 : i32
    %c0_i32_0 = arith.constant 0 : i32
    %c0_i32_1 = arith.constant 0 : i32
    return %c0_i32, %c0_i32_0 : i32, i32
  }
  func.func @transform_10(%arg0: i32) -> (i32, i32) {
    %c0_i32 = arith.constant 0 : i32
    %c0_i32_0 = arith.constant 0 : i32
    %c0_i32_1 = arith.constant 0 : i32
    return %c0_i32, %c0_i32_0 : i32, i32
  }
}

</mosaic_0001>

<llo_original>
// kernel: neg.1
$region0: #{neg.1}
  #allocation0 [shape = 's32[1]{0}', space=sflag, size = 0x4, scoped, tag = 'scoped memory for neg.1']
  %s0 = inlined_call_operand.vmem [shape: f32[2,12], index: 0, kind: input, shape index: {}]
  %s1 = inlined_call_operand.vmem [shape: f32[2,12], index: 1, kind: output, shape index: {}]
  %v2 = vld [vmem:[%s0] sm:$0x3]
  %3 = xla_tuple %v2
  %4 = xla_tuple %3
  %v5 = vxor.u32 %v2, 2147483648
  %6 = xla_tuple %v5
  %7 = vst [vmem:[%s1] sm:$0x3] %v5

// kernel: dgcnn_forward.2
$region0: #{dgcnn_forward.2}
  #allocation0 [shape = 'u32[]', space=smem, size = 0x4, offset = 0x4, fixed_abs, tag = 'smem constant byte address 0x4 - core index']
  #allocation1 [shape = 'u32[144,128]{1,0:T(1,128)}', space=vmem, size = 0x12000, scoped, tag = 'internal scratch']
  #allocation2 [shape = 'f32[1,1]{1,0:T(1,128)S(1)}', space=vmem, size = 0x200, scoped, tag = 'scoped memory for dgcnn_forward.2']
  %s0 = inlined_call_operand.vmem [shape: f32[24,24], index: 0, kind: input, shape index: {}]
  %s1 = inlined_call_operand.vmem [shape: f32[24,32], index: 1, kind: input, shape index: {}]
  %s2 = inlined_call_operand.vmem [shape: f32[4,32,32], index: 2, kind: input, shape index: {}]
  %s3 = inlined_call_operand.vmem [shape: f32[4,1,32], index: 3, kind: input, shape index: {}]
  %s4 = inlined_call_operand.vmem [shape: f32[32,1], index: 4, kind: input, shape index: {}]
  %s5 = inlined_call_operand.<no memory space> [shape: f32[1,1], index: 5, kind: input, shape index: {}]
  %s6 = inlined_call_operand.vmem [shape: f32[24,128], index: 6, kind: output, shape index: {0}]
  %s7 = inlined_call_operand.vmem [shape: f32[24,1], index: 7, kind: output, shape index: {1}]
  %8 = xla_tuple %s6, %s7
  %s9 = sld [smem:[#allocation0]]
  $region42: #{dgcnn_forward.2} parent=0
    _
  %s11 = ssub.s32 1, %s9
  %s12 = scalar_select 0, %s11, %s9
  %v13 = vstv %s5
  %14 = vst [vmem:[#allocation2] sm:$0x1] %v13
  // Predicated region
  $region2: #{dgcnn_forward.2} parent=0 // pred_check
    _
  $region3: #{dgcnn_forward.2} parent=0 // pred_check_branch
    %16 = sbr.rel (0) target = $region5
  $region4: #{dgcnn_forward.2} parent=0 // pred_region
    _
  $region5: #{dgcnn_forward.2} parent=0 // pred_fallthru
    _
  // Predicated region
  $region6: #{dgcnn_forward.2} parent=0 // pred_check
    _
  $region7: #{dgcnn_forward.2} parent=0 // pred_check_branch
    %18 = sbr.rel (0) target = $region9
  $region8: #{dgcnn_forward.2} parent=0 // pred_region
    _
  $region9: #{dgcnn_forward.2} parent=0 // pred_fallthru
    _
  // Predicated region
  $region10: #{dgcnn_forward.2} parent=0 // pred_check
    _
  $region11: #{dgcnn_forward.2} parent=0 // pred_check_branch
    %20 = sbr.rel (0) target = $region13
  $region12: #{dgcnn_forward.2} parent=0 // pred_region
    _
  $region13: #{dgcnn_forward.2} parent=0 // pred_fallthru
    _
  // Predicated region
  $region14: #{dgcnn_forward.2} parent=0 // pred_check
    _
  $region15: #{dgcnn_forward.2} parent=0 // pred_check_branch
    %22 = sbr.rel (0) target = $region17
  $region16: #{dgcnn_forward.2} parent=0 // pred_region
    _
  $region17: #{dgcnn_forward.2} parent=0 // pred_fallthru
    _
  // Predicated region
  $region18: #{dgcnn_forward.2} parent=0 // pred_check
    _
  $region19: #{dgcnn_forward.2} parent=0 // pred_check_branch
    %24 = sbr.rel (0) target = $region21
  $region20: #{dgcnn_forward.2} parent=0 // pred_region
    _
  $region21: #{dgcnn_forward.2} parent=0 // pred_fallthru
    _
  // Predicated region
  $region22: #{dgcnn_forward.2} parent=0 // pred_check
    _
  $region23: #{dgcnn_forward.2} parent=0 // pred_check_branch
    %26 = sbr.rel (0) target = $region25
  $region24: #{dgcnn_forward.2} parent=0 // pred_region
    _
  $region25: #{dgcnn_forward.2} parent=0 // pred_fallthru
    _
  %v28 = vld [vmem:[%s0] sm:$0xff]
  %v29 = vld [vmem:[%s0 + $0x8] sm:$0xff]
  %v30 = vld [vmem:[%s0 + $0x10] sm:$0xff]
  %v31 = vpack.c.bf16 %v29, %v28
  %v32 = vpack.c.bf16 %v30, %v30
  %v33 = vld [vmem:[%s1] sm:$0xff]
  %v34 = vld [vmem:[%s1 + $0x8] sm:$0xff]
  %v35 = vld [vmem:[%s1 + $0x10] sm:$0xff]
  %v36 = vld [vmem:[%s2] sm:$0xff]
  %v37 = vld [vmem:[%s2 + $0x8] sm:$0xff]
  %v38 = vld [vmem:[%s2 + $0x10] sm:$0xff]
  %v39 = vld [vmem:[%s2 + $0x18] sm:$0xff]
  %v40 = vpack.c.bf16 %v37, %v36
  %v41 = vpack.c.bf16 %v39, %v38
  %v42 = vpack.c.bf16 %v34, %v33
  %v43 = vpack.c.bf16 %v35, %v35
  %vm44 = vcmask 261120
  %v46 = vsel %vm44, %v42, 0
  %v49 = vsel %vm44, %v43, 0
  %51 = vmatprep.subr.bf16.mxu0 0
  %52 = vmatpush1.bf16.msra.mxu0 0
  %53 = vmatprep.subr.bf16.mxu0 0
  %54 = vmatpush1.bf16.msra.mxu0 0
  %55 = vmatprep.subr.bf16.mxu0 0
  %56 = vmatpush1.bf16.msra.mxu0 0
  %57 = vmatprep.subr.bf16.mxu0 0
  %58 = vmatpush1.bf16.msra.mxu0 0
  %59 = vmatprep.subr.bf16.mxu0 0
  %60 = vmatpush1.bf16.msra.mxu0 0
  %61 = vmatprep.subr.bf16.mxu0 0
  %62 = vmatpush1.bf16.msra.mxu0 0
  %63 = vmatprep.subr.bf16.mxu0 0
  %64 = vmatpush1.bf16.msra.mxu0 %v41
  %65 = vmatprep.subr.bf16.mxu0 0
  %66 = vmatpush1.bf16.msra.mxu0 %v40
  %67 = vmatprep.subr.bf16.mxu0 0
  %68 = vmatpush2.bf16.msra.mxu0 0
  %69 = vmatprep.subr.bf16.mxu0 0
  %70 = vmatpush2.bf16.msra.mxu0 0
  %71 = vmatprep.subr.bf16.mxu0 0
  %72 = vmatpush2.bf16.msra.mxu0 0
  %73 = vmatprep.subr.bf16.mxu0 0
  %74 = vmatpush2.bf16.msra.mxu0 0
  %75 = vmatprep.subr.bf16.mxu0 0
  %76 = vmatpush2.bf16.msra.mxu0 0
  %77 = vmatprep.subr.bf16.mxu0 0
  %78 = vmatpush2.bf16.msra.mxu0 0
  %79 = vmatprep.subr.bf16.mxu0 0
  %80 = vmatpush2.bf16.msra.mxu0 0
  %81 = vmatprep.subr.bf16.mxu0 0
  %82 = vmatpush2.bf16.msra.mxu0 0
  %83 = vmatprep.mubr.bf16.mxu0 0
  %84 = vmatmul.mubr.bf16.gmra.mxu0 %v46
  %v85 = vpop.f32.mrf.mxu0
  %v86 = vadd.f32 0.0, %v85
  %v87 = vpop.f32.mrf.mxu0
  %v88 = vpop.f32.mrf.mxu0
  %v89 = vadd.f32 0.0, %v88
  %v90 = vpop.f32.mrf.mxu0
  %91 = vmatprep.mubr.bf16.mxu0 0
  %92 = vmatmul.mubr.bf16.gmra.mxu0 %v49
  %v93 = vpop.f32.mrf.mxu0
  %v94 = vadd.f32 0.0, %v93
  %v95 = vpop.f32.mrf.mxu0
  %v96 = vpop.f32.mrf.mxu0
  %v97 = vpop.f32.mrf.mxu0
  %98 = vdwg.mxu0
  %v99 = vpack.c.bf16 %v89, %v86
  %v100 = vpack.c.bf16 %v94, %v94
  %v101 = vld [vmem:[%s3] sm:$0x1]
  %v103 = vlaneseq
  %v104 = vshrl.u32 %v103, 7
  %v105 = vsub.s32 0, %v104
  %v106 = vrot.slane %v101, %v105
  %vm108 = vcmask 195584
  %v110 = vsel %vm108, %v31, 0
  %v113 = vsel %vm108, %v32, 0
  %vm115 = vcmask 1043456
  %v117 = vsel %vm115, %v100, 0
  %119 = vmatprep.subr.bf16.mxu0 0
  %120 = vmatpush1.bf16.msra.mxu0 0
  %121 = vmatprep.subr.bf16.mxu0 0
  %122 = vmatpush1.bf16.msra.mxu0 0
  %123 = vmatprep.subr.bf16.mxu0 0
  %124 = vmatpush1.bf16.msra.mxu0 0
  %125 = vmatprep.subr.bf16.mxu0 0
  %126 = vmatpush1.bf16.msra.mxu0 0
  %127 = vmatprep.subr.bf16.mxu0 0
  %128 = vmatpush1.bf16.msra.mxu0 0
  %129 = vmatprep.subr.bf16.mxu0 0
  %130 = vmatpush1.bf16.msra.mxu0 0
  %131 = vmatprep.subr.bf16.mxu0 0
  %132 = vmatpush1.bf16.msra.mxu0 %v117
  %133 = vmatprep.subr.bf16.mxu0 0
  %134 = vmatpush1.bf16.msra.mxu0 %v99
  %135 = vmatprep.subr.bf16.mxu0 0
  %136 = vmatpush2.bf16.msra.mxu0 0
  %137 = vmatprep.subr.bf16.mxu0 0
  %138 = vmatpush2.bf16.msra.mxu0 0
  %139 = vmatprep.subr.bf16.mxu0 0
  %140 = vmatpush2.bf16.msra.mxu0 0
  %141 = vmatprep.subr.bf16.mxu0 0
  %142 = vmatpush2.bf16.msra.mxu0 0
  %143 = vmatprep.subr.bf16.mxu0 0
  %144 = vmatpush2.bf16.msra.mxu0 0
  %145 = vmatprep.subr.bf16.mxu0 0
  %146 = vmatpush2.bf16.msra.mxu0 0
  %147 = vmatprep.subr.bf16.mxu0 0
  %148 = vmatpush2.bf16.msra.mxu0 0
  %149 = vmatprep.subr.bf16.mxu0 0
  %150 = vmatpush2.bf16.msra.mxu0 0
  %151 = vmatprep.mubr.bf16.mxu0 0
  %152 = vmatmul.mubr.bf16.gmra.mxu0 %v110
  %v153 = vpop.f32.mrf.mxu0
  %v154 = vadd.f32 %v106, %v153
  %v155 = vpop.f32.mrf.mxu0
  %v156 = vpop.f32.mrf.mxu0
  %v157 = vadd.f32 %v106, %v156
  %v158 = vpop.f32.mrf.mxu0
  %159 = vmatprep.mubr.bf16.mxu0 0
  %160 = vmatmul.mubr.bf16.gmra.mxu0 %v113
  %v161 = vpop.f32.mrf.mxu0
  %v162 = vadd.f32 %v106, %v161
  %v163 = vpop.f32.mrf.mxu0
  %v164 = vpop.f32.mrf.mxu0
  %v165 = vpop.f32.mrf.mxu0
  %166 = vdwg.mxu0
  %v167 = vtanh.pop %v154
  %v168 = vtanh.pop %v157
  %v169 = vtanh.pop %v162
  %170 = vst.msk [vmem:[%s6] sm:$0xff] %vm44, %v167
  %171 = vst.msk [vmem:[%s6 + $0x8] sm:$0xff] %vm44, %v168
  %172 = vst.msk [vmem:[%s6 + $0x10] sm:$0xff] %vm44, %v169
  %s173 = scalar_lea.vmem %s2, 32
  %v174 = vld [vmem:[%s173] sm:$0xff]
  %v175 = vld [vmem:[%s173 + $0x8] sm:$0xff]
  %v176 = vld [vmem:[%s173 + $0x10] sm:$0xff]
  %v177 = vld [vmem:[%s173 + $0x18] sm:$0xff]
  %v178 = vpack.c.bf16 %v175, %v174
  %v179 = vpack.c.bf16 %v177, %v176
  %v180 = vpack.c.bf16 %v168, %v167
  %v181 = vpack.c.bf16 %v169, %v169
  %v183 = vsel %vm44, %v180, 0
  %v186 = vsel %vm44, %v181, 0
  %188 = vmatprep.subr.bf16.mxu0 0
  %189 = vmatpush1.bf16.msra.mxu0 0
  %190 = vmatprep.subr.bf16.mxu0 0
  %191 = vmatpush1.bf16.msra.mxu0 0
  %192 = vmatprep.subr.bf16.mxu0 0
  %193 = vmatpush1.bf16.msra.mxu0 0
  %194 = vmatprep.subr.bf16.mxu0 0
  %195 = vmatpush1.bf16.msra.mxu0 0
  %196 = vmatprep.subr.bf16.mxu0 0
  %197 = vmatpush1.bf16.msra.mxu0 0
  %198 = vmatprep.subr.bf16.mxu0 0
  %199 = vmatpush1.bf16.msra.mxu0 0
  %200 = vmatprep.subr.bf16.mxu0 0
  %201 = vmatpush1.bf16.msra.mxu0 %v179
  %202 = vmatprep.subr.bf16.mxu0 0
  %203 = vmatpush1.bf16.msra.mxu0 %v178
  %204 = vmatprep.subr.bf16.mxu0 0
  %205 = vmatpush2.bf16.msra.mxu0 0
  %206 = vmatprep.subr.bf16.mxu0 0
  %207 = vmatpush2.bf16.msra.mxu0 0
  %208 = vmatprep.subr.bf16.mxu0 0
  %209 = vmatpush2.bf16.msra.mxu0 0
  %210 = vmatprep.subr.bf16.mxu0 0
  %211 = vmatpush2.bf16.msra.mxu0 0
  %212 = vmatprep.subr.bf16.mxu0 0
  %213 = vmatpush2.bf16.msra.mxu0 0
  %214 = vmatprep.subr.bf16.mxu0 0
  %215 = vmatpush2.bf16.msra.mxu0 0
  %216 = vmatprep.subr.bf16.mxu0 0
  %217 = vmatpush2.bf16.msra.mxu0 0
  %218 = vmatprep.subr.bf16.mxu0 0
  %219 = vmatpush2.bf16.msra.mxu0 0
  %220 = vmatprep.mubr.bf16.mxu0 0
  %221 = vmatmul.mubr.bf16.gmra.mxu0 %v183
  %v222 = vpop.f32.mrf.mxu0
  %v223 = vadd.f32 0.0, %v222
  %v224 = vpop.f32.mrf.mxu0
  %v225 = vpop.f32.mrf.mxu0
  %v226 = vadd.f32 0.0, %v225
  %v227 = vpop.f32.mrf.mxu0
  %228 = vmatprep.mubr.bf16.mxu0 0
  %229 = vmatmul.mubr.bf16.gmra.mxu0 %v186
  %v230 = vpop.f32.mrf.mxu0
  %v231 = vadd.f32 0.0, %v230
  %v232 = vpop.f32.mrf.mxu0
  %v233 = vpop.f32.mrf.mxu0
  %v234 = vpop.f32.mrf.mxu0
  %235 = vdwg.mxu0
  %v236 = vpack.c.bf16 %v226, %v223
  %v237 = vpack.c.bf16 %v231, %v231
  %s238 = scalar_lea.vmem %s3, 1
  %v239 = vld [vmem:[%s238] sm:$0x1]
  %v241 = vlaneseq
  %v242 = vshrl.u32 %v241, 7
  %v243 = vsub.s32 0, %v242
  %v244 = vrot.slane %v239, %v243
  %v247 = vsel %vm115, %v237, 0
  %249 = vmatprep.subr.bf16.mxu0 0
  %250 = vmatpush1.bf16.msra.mxu0 0
  %251 = vmatprep.subr.bf16.mxu0 0
  %252 = vmatpush1.bf16.msra.mxu0 0
  %253 = vmatprep.subr.bf16.mxu0 0
  %254 = vmatpush1.bf16.msra.mxu0 0
  %255 = vmatprep.subr.bf16.mxu0 0
  %256 = vmatpush1.bf16.msra.mxu0 0
  %257 = vmatprep.subr.bf16.mxu0 0
  %258 = vmatpush1.bf16.msra.mxu0 0
  %259 = vmatprep.subr.bf16.mxu0 0
  %260 = vmatpush1.bf16.msra.mxu0 0
  %261 = vmatprep.subr.bf16.mxu0 0
  %262 = vmatpush1.bf16.msra.mxu0 %v247
  %263 = vmatprep.subr.bf16.mxu0 0
  %264 = vmatpush1.bf16.msra.mxu0 %v236
  %265 = vmatprep.subr.bf16.mxu0 0
  %266 = vmatpush2.bf16.msra.mxu0 0
  %267 = vmatprep.subr.bf16.mxu0 0
  %268 = vmatpush2.bf16.msra.mxu0 0
  %269 = vmatprep.subr.bf16.mxu0 0
  %270 = vmatpush2.bf16.msra.mxu0 0
  %271 = vmatprep.subr.bf16.mxu0 0
  %272 = vmatpush2.bf16.msra.mxu0 0
  %273 = vmatprep.subr.bf16.mxu0 0
  %274 = vmatpush2.bf16.msra.mxu0 0
  %275 = vmatprep.subr.bf16.mxu0 0
  %276 = vmatpush2.bf16.msra.mxu0 0
  %277 = vmatprep.subr.bf16.mxu0 0
  %278 = vmatpush2.bf16.msra.mxu0 0
  %279 = vmatprep.subr.bf16.mxu0 0
  %280 = vmatpush2.bf16.msra.mxu0 0
  %281 = vmatprep.mubr.bf16.mxu0 0
  %282 = vmatmul.mubr.bf16.gmra.mxu0 %v110
  %v283 = vpop.f32.mrf.mxu0
  %v284 = vadd.f32 %v244, %v283
  %v285 = vpop.f32.mrf.mxu0
  %v286 = vpop.f32.mrf.mxu0
  %v287 = vadd.f32 %v244, %v286
  %v288 = vpop.f32.mrf.mxu0
  %289 = vmatprep.mubr.bf16.mxu0 0
  %290 = vmatmul.mubr.bf16.gmra.mxu0 %v113
  %v291 = vpop.f32.mrf.mxu0
  %v292 = vadd.f32 %v244, %v291
  %v293 = vpop.f32.mrf.mxu0
  %v294 = vpop.f32.mrf.mxu0
  %v295 = vpop.f32.mrf.mxu0
  %296 = vdwg.mxu0
  %v297 = vtanh.pop %v284
  %v298 = vtanh.pop %v287
  %v299 = vtanh.pop %v292
  %303 = vrot.lane.b32.xlu0 %v297, 32
  %v304 = vpop.permute.xlu0 %303
  %305 = vrot.lane.b32.xlu0 %v298, 32
  %v306 = vpop.permute.xlu0 %305
  %307 = vrot.lane.b32.xlu0 %v299, 32
  %v308 = vpop.permute.xlu0 %307
  %vm312 = vcmask 523520
  %313 = vst.msk [vmem:[%s6] sm:$0xff] %vm312, %v304
  %314 = vst.msk [vmem:[%s6 + $0x8] sm:$0xff] %vm312, %v306
  %315 = vst.msk [vmem:[%s6 + $0x10] sm:$0xff] %vm312, %v308
  %s316 = scalar_lea.vmem %s2, 64
  %v317 = vld [vmem:[%s316] sm:$0xff]
  %v318 = vld [vmem:[%s316 + $0x8] sm:$0xff]
  %v319 = vld [vmem:[%s316 + $0x10] sm:$0xff]
  %v320 = vld [vmem:[%s316 + $0x18] sm:$0xff]
  %v321 = vpack.c.bf16 %v318, %v317
  %v322 = vpack.c.bf16 %v320, %v319
  %v323 = vpack.c.bf16 %v298, %v297
  %v324 = vpack.c.bf16 %v299, %v299
  %v326 = vsel %vm44, %v323, 0
  %v329 = vsel %vm44, %v324, 0
  %331 = vmatprep.subr.bf16.mxu0 0
  %332 = vmatpush1.bf16.msra.mxu0 0
  %333 = vmatprep.subr.bf16.mxu0 0
  %334 = vmatpush1.bf16.msra.mxu0 0
  %335 = vmatprep.subr.bf16.mxu0 0
  %336 = vmatpush1.bf16.msra.mxu0 0
  %337 = vmatprep.subr.bf16.mxu0 0
  %338 = vmatpush1.bf16.msra.mxu0 0
  %339 = vmatprep.subr.bf16.mxu0 0
  %340 = vmatpush1.bf16.msra.mxu0 0
  %341 = vmatprep.subr.bf16.mxu0 0
  %342 = vmatpush1.bf16.msra.mxu0 0
  %343 = vmatprep.subr.bf16.mxu0 0
  %344 = vmatpush1.bf16.msra.mxu0 %v322
  %345 = vmatprep.subr.bf16.mxu0 0
  %346 = vmatpush1.bf16.msra.mxu0 %v321
  %347 = vmatprep.subr.bf16.mxu0 0
  %348 = vmatpush2.bf16.msra.mxu0 0
  %349 = vmatprep.subr.bf16.mxu0 0
  %350 = vmatpush2.bf16.msra.mxu0 0
  %351 = vmatprep.subr.bf16.mxu0 0
  %352 = vmatpush2.bf16.msra.mxu0 0
  %353 = vmatprep.subr.bf16.mxu0 0
  %354 = vmatpush2.bf16.msra.mxu0 0
  %355 = vmatprep.subr.bf16.mxu0 0
  %356 = vmatpush2.bf16.msra.mxu0 0
  %357 = vmatprep.subr.bf16.mxu0 0
  %358 = vmatpush2.bf16.msra.mxu0 0
  %359 = vmatprep.subr.bf16.mxu0 0
  %360 = vmatpush2.bf16.msra.mxu0 0
  %361 = vmatprep.subr.bf16.mxu0 0
  %362 = vmatpush2.bf16.msra.mxu0 0
  %363 = vmatprep.mubr.bf16.mxu0 0
  %364 = vmatmul.mubr.bf16.gmra.mxu0 %v326
  %v365 = vpop.f32.mrf.mxu0
  %v366 = vadd.f32 0.0, %v365
  %v367 = vpop.f32.mrf.mxu0
  %v368 = vpop.f32.mrf.mxu0
  %v369 = vadd.f32 0.0, %v368
  %v370 = vpop.f32.mrf.mxu0
  %371 = vmatprep.mubr.bf16.mxu0 0
  %372 = vmatmul.mubr.bf16.gmra.mxu0 %v329
  %v373 = vpop.f32.mrf.mxu0
  %v374 = vadd.f32 0.0, %v373
  %v375 = vpop.f32.mrf.mxu0
  %v376 = vpop.f32.mrf.mxu0
  %v377 = vpop.f32.mrf.mxu0
  %378 = vdwg.mxu0
  %v379 = vpack.c.bf16 %v369, %v366
  %v380 = vpack.c.bf16 %v374, %v374
  %s381 = scalar_lea.vmem %s3, 2
  %v382 = vld [vmem:[%s381] sm:$0x1]
  %v384 = vlaneseq
  %v385 = vshrl.u32 %v384, 7
  %v386 = vsub.s32 0, %v385
  %v387 = vrot.slane %v382, %v386
  %v390 = vsel %vm115, %v380, 0
  %392 = vmatprep.subr.bf16.mxu0 0
  %393 = vmatpush1.bf16.msra.mxu0 0
  %394 = vmatprep.subr.bf16.mxu0 0
  %395 = vmatpush1.bf16.msra.mxu0 0
  %396 = vmatprep.subr.bf16.mxu0 0
  %397 = vmatpush1.bf16.msra.mxu0 0
  %398 = vmatprep.subr.bf16.mxu0 0
  %399 = vmatpush1.bf16.msra.mxu0 0
  %400 = vmatprep.subr.bf16.mxu0 0
  %401 = vmatpush1.bf16.msra.mxu0 0
  %402 = vmatprep.subr.bf16.mxu0 0
  %403 = vmatpush1.bf16.msra.mxu0 0
  %404 = vmatprep.subr.bf16.mxu0 0
  %405 = vmatpush1.bf16.msra.mxu0 %v390
  %406 = vmatprep.subr.bf16.mxu0 0
  %407 = vmatpush1.bf16.msra.mxu0 %v379
  %408 = vmatprep.subr.bf16.mxu0 0
  %409 = vmatpush2.bf16.msra.mxu0 0
  %410 = vmatprep.subr.bf16.mxu0 0
  %411 = vmatpush2.bf16.msra.mxu0 0
  %412 = vmatprep.subr.bf16.mxu0 0
  %413 = vmatpush2.bf16.msra.mxu0 0
  %414 = vmatprep.subr.bf16.mxu0 0
  %415 = vmatpush2.bf16.msra.mxu0 0
  %416 = vmatprep.subr.bf16.mxu0 0
  %417 = vmatpush2.bf16.msra.mxu0 0
  %418 = vmatprep.subr.bf16.mxu0 0
  %419 = vmatpush2.bf16.msra.mxu0 0
  %420 = vmatprep.subr.bf16.mxu0 0
  %421 = vmatpush2.bf16.msra.mxu0 0
  %422 = vmatprep.subr.bf16.mxu0 0
  %423 = vmatpush2.bf16.msra.mxu0 0
  %424 = vmatprep.mubr.bf16.mxu0 0
  %425 = vmatmul.mubr.bf16.gmra.mxu0 %v110
  %v426 = vpop.f32.mrf.mxu0
  %v427 = vadd.f32 %v387, %v426
  %v428 = vpop.f32.mrf.mxu0
  %v429 = vpop.f32.mrf.mxu0
  %v430 = vadd.f32 %v387, %v429
  %v431 = vpop.f32.mrf.mxu0
  %432 = vmatprep.mubr.bf16.mxu0 0
  %433 = vmatmul.mubr.bf16.gmra.mxu0 %v113
  %v434 = vpop.f32.mrf.mxu0
  %v435 = vadd.f32 %v387, %v434
  %v436 = vpop.f32.mrf.mxu0
  %v437 = vpop.f32.mrf.mxu0
  %v438 = vpop.f32.mrf.mxu0
  %439 = vdwg.mxu0
  %v440 = vtanh.pop %v427
  %v441 = vtanh.pop %v430
  %v442 = vtanh.pop %v435
  %446 = vrot.lane.b32.xlu0 %v440, 64
  %v447 = vpop.permute.xlu0 %446
  %448 = vrot.lane.b32.xlu0 %v441, 64
  %v449 = vpop.permute.xlu0 %448
  %450 = vrot.lane.b32.xlu0 %v442, 64
  %v451 = vpop.permute.xlu0 %450
  %vm455 = vcmask 785920
  %456 = vst.msk [vmem:[%s6] sm:$0xff] %vm455, %v447
  %457 = vst.msk [vmem:[%s6 + $0x8] sm:$0xff] %vm455, %v449
  %458 = vst.msk [vmem:[%s6 + $0x10] sm:$0xff] %vm455, %v451
  %s459 = scalar_lea.vmem %s2, 96
  %v460 = vld [vmem:[%s459] sm:$0xff]
  %v461 = vld [vmem:[%s459 + $0x8] sm:$0xff]
  %v462 = vld [vmem:[%s459 + $0x10] sm:$0xff]
  %v463 = vld [vmem:[%s459 + $0x18] sm:$0xff]
  %v464 = vpack.c.bf16 %v461, %v460
  %v465 = vpack.c.bf16 %v463, %v462
  %v466 = vpack.c.bf16 %v441, %v440
  %v467 = vpack.c.bf16 %v442, %v442
  %v469 = vsel %vm44, %v466, 0
  %v472 = vsel %vm44, %v467, 0
  %474 = vmatprep.subr.bf16.mxu0 0
  %475 = vmatpush1.bf16.msra.mxu0 0
  %476 = vmatprep.subr.bf16.mxu0 0
  %477 = vmatpush1.bf16.msra.mxu0 0
  %478 = vmatprep.subr.bf16.mxu0 0
  %479 = vmatpush1.bf16.msra.mxu0 0
  %480 = vmatprep.subr.bf16.mxu0 0
  %481 = vmatpush1.bf16.msra.mxu0 0
  %482 = vmatprep.subr.bf16.mxu0 0
  %483 = vmatpush1.bf16.msra.mxu0 0
  %484 = vmatprep.subr.bf16.mxu0 0
  %485 = vmatpush1.bf16.msra.mxu0 0
  %486 = vmatprep.subr.bf16.mxu0 0
  %487 = vmatpush1.bf16.msra.mxu0 %v465
  %488 = vmatprep.subr.bf16.mxu0 0
  %489 = vmatpush1.bf16.msra.mxu0 %v464
  %490 = vmatprep.subr.bf16.mxu0 0
  %491 = vmatpush2.bf16.msra.mxu0 0
  %492 = vmatprep.subr.bf16.mxu0 0
  %493 = vmatpush2.bf16.msra.mxu0 0
  %494 = vmatprep.subr.bf16.mxu0 0
  %495 = vmatpush2.bf16.msra.mxu0 0
  %496 = vmatprep.subr.bf16.mxu0 0
  %497 = vmatpush2.bf16.msra.mxu0 0
  %498 = vmatprep.subr.bf16.mxu0 0
  %499 = vmatpush2.bf16.msra.mxu0 0
  %500 = vmatprep.subr.bf16.mxu0 0
  %501 = vmatpush2.bf16.msra.mxu0 0
  %502 = vmatprep.subr.bf16.mxu0 0
  %503 = vmatpush2.bf16.msra.mxu0 0
  %504 = vmatprep.subr.bf16.mxu0 0
  %505 = vmatpush2.bf16.msra.mxu0 0
  %506 = vmatprep.mubr.bf16.mxu0 0
  %507 = vmatmul.mubr.bf16.gmra.mxu0 %v469
  %v508 = vpop.f32.mrf.mxu0
  %v509 = vadd.f32 0.0, %v508
  %v510 = vpop.f32.mrf.mxu0
  %v511 = vpop.f32.mrf.mxu0
  %v512 = vadd.f32 0.0, %v511
  %v513 = vpop.f32.mrf.mxu0
  %514 = vmatprep.mubr.bf16.mxu0 0
  %515 = vmatmul.mubr.bf16.gmra.mxu0 %v472
  %v516 = vpop.f32.mrf.mxu0
  %v517 = vadd.f32 0.0, %v516
  %v518 = vpop.f32.mrf.mxu0
  %v519 = vpop.f32.mrf.mxu0
  %v520 = vpop.f32.mrf.mxu0
  %521 = vdwg.mxu0
  %v522 = vpack.c.bf16 %v512, %v509
  %v523 = vpack.c.bf16 %v517, %v517
  %s524 = scalar_lea.vmem %s3, 3
  %v525 = vld [vmem:[%s524] sm:$0x1]
  %v527 = vlaneseq
  %v528 = vshrl.u32 %v527, 7
  %v529 = vsub.s32 0, %v528
  %v530 = vrot.slane %v525, %v529
  %v533 = vsel %vm115, %v523, 0
  %535 = vmatprep.subr.bf16.mxu0 0
  %536 = vmatpush1.bf16.msra.mxu0 0
  %537 = vmatprep.subr.bf16.mxu0 0
  %538 = vmatpush1.bf16.msra.mxu0 0
  %539 = vmatprep.subr.bf16.mxu0 0
  %540 = vmatpush1.bf16.msra.mxu0 0
  %541 = vmatprep.subr.bf16.mxu0 0
  %542 = vmatpush1.bf16.msra.mxu0 0
  %543 = vmatprep.subr.bf16.mxu0 0
  %544 = vmatpush1.bf16.msra.mxu0 0
  %545 = vmatprep.subr.bf16.mxu0 0
  %546 = vmatpush1.bf16.msra.mxu0 0
  %547 = vmatprep.subr.bf16.mxu0 0
  %548 = vmatpush1.bf16.msra.mxu0 %v533
  %549 = vmatprep.subr.bf16.mxu0 0
  %550 = vmatpush1.bf16.msra.mxu0 %v522
  %551 = vmatprep.subr.bf16.mxu0 0
  %552 = vmatpush2.bf16.msra.mxu0 0
  %553 = vmatprep.subr.bf16.mxu0 0
  %554 = vmatpush2.bf16.msra.mxu0 0
  %555 = vmatprep.subr.bf16.mxu0 0
  %556 = vmatpush2.bf16.msra.mxu0 0
  %557 = vmatprep.subr.bf16.mxu0 0
  %558 = vmatpush2.bf16.msra.mxu0 0
  %559 = vmatprep.subr.bf16.mxu0 0
  %560 = vmatpush2.bf16.msra.mxu0 0
  %561 = vmatprep.subr.bf16.mxu0 0
  %562 = vmatpush2.bf16.msra.mxu0 0
  %563 = vmatprep.subr.bf16.mxu0 0
  %564 = vmatpush2.bf16.msra.mxu0 0
  %565 = vmatprep.subr.bf16.mxu0 0
  %566 = vmatpush2.bf16.msra.mxu0 0
  %567 = vmatprep.mubr.bf16.mxu0 0
  %568 = vmatmul.mubr.bf16.gmra.mxu0 %v110
  %v569 = vpop.f32.mrf.mxu0
  %v570 = vadd.f32 %v530, %v569
  %v571 = vpop.f32.mrf.mxu0
  %v572 = vpop.f32.mrf.mxu0
  %v573 = vadd.f32 %v530, %v572
  %v574 = vpop.f32.mrf.mxu0
  %575 = vmatprep.mubr.bf16.mxu0 0
  %576 = vmatmul.mubr.bf16.gmra.mxu0 %v113
  %v577 = vpop.f32.mrf.mxu0
  %v578 = vadd.f32 %v530, %v577
  %v579 = vpop.f32.mrf.mxu0
  %v580 = vpop.f32.mrf.mxu0
  %v581 = vpop.f32.mrf.mxu0
  %582 = vdwg.mxu0
  %v583 = vtanh.pop %v570
  %v584 = vtanh.pop %v573
  %v585 = vtanh.pop %v578
  %589 = vrot.lane.b32.xlu0 %v583, 96
  %v590 = vpop.permute.xlu0 %589
  %591 = vrot.lane.b32.xlu0 %v584, 96
  %v592 = vpop.permute.xlu0 %591
  %593 = vrot.lane.b32.xlu0 %v585, 96
  %v594 = vpop.permute.xlu0 %593
  %vm598 = vcmask 1048320
  %599 = vst.msk [vmem:[%s6] sm:$0xff] %vm598, %v590
  %600 = vst.msk [vmem:[%s6 + $0x8] sm:$0xff] %vm598, %v592
  %601 = vst.msk [vmem:[%s6 + $0x10] sm:$0xff] %vm598, %v594
  %v602 = vpack.c.bf16 %v584, %v583
  %v603 = vpack.c.bf16 %v585, %v585
  %v604 = vld [vmem:[%s4] sm:$0xff]
  %v605 = vld [vmem:[%s4 + $0x8] sm:$0xff]
  %v606 = vld [vmem:[%s4 + $0x10] sm:$0xff]
  %v607 = vld [vmem:[%s4 + $0x18] sm:$0xff]
  %v608 = vpack.c.bf16 %v605, %v604
  %v609 = vpack.c.bf16 %v607, %v606
  %v611 = vsel %vm44, %v602, 0
  %v614 = vsel %vm44, %v603, 0
  %616 = vmatprep.subr.bf16.mxu0 0
  %617 = vmatpush1.bf16.msra.mxu0 0
  %618 = vmatprep.subr.bf16.mxu0 0
  %619 = vmatpush1.bf16.msra.mxu0 0
  %620 = vmatprep.subr.bf16.mxu0 0
  %621 = vmatpush1.bf16.msra.mxu0 0
  %622 = vmatprep.subr.bf16.mxu0 0
  %623 = vmatpush1.bf16.msra.mxu0 0
  %624 = vmatprep.subr.bf16.mxu0 0
  %625 = vmatpush1.bf16.msra.mxu0 0
  %626 = vmatprep.subr.bf16.mxu0 0
  %627 = vmatpush1.bf16.msra.mxu0 0
  %628 = vmatprep.subr.bf16.mxu0 0
  %629 = vmatpush1.bf16.msra.mxu0 %v609
  %630 = vmatprep.subr.bf16.mxu0 0
  %631 = vmatpush1.bf16.msra.mxu0 %v608
  %632 = vmatprep.subr.bf16.mxu0 0
  %633 = vmatpush2.bf16.msra.mxu0 0
  %634 = vmatprep.subr.bf16.mxu0 0
  %635 = vmatpush2.bf16.msra.mxu0 0
  %636 = vmatprep.subr.bf16.mxu0 0
  %637 = vmatpush2.bf16.msra.mxu0 0
  %638 = vmatprep.subr.bf16.mxu0 0
  %639 = vmatpush2.bf16.msra.mxu0 0
  %640 = vmatprep.subr.bf16.mxu0 0
  %641 = vmatpush2.bf16.msra.mxu0 0
  %642 = vmatprep.subr.bf16.mxu0 0
  %643 = vmatpush2.bf16.msra.mxu0 0
  %644 = vmatprep.subr.bf16.mxu0 0
  %645 = vmatpush2.bf16.msra.mxu0 0
  %646 = vmatprep.subr.bf16.mxu0 0
  %647 = vmatpush2.bf16.msra.mxu0 0
  %648 = vmatprep.mubr.bf16.mxu0 0
  %649 = vmatmul.mubr.bf16.gmra.mxu0 %v611
  %v650 = vpop.f32.mrf.mxu0
  %v651 = vadd.f32 0.0, %v650
  %v652 = vpop.f32.mrf.mxu0
  %v653 = vpop.f32.mrf.mxu0
  %v654 = vadd.f32 0.0, %v653
  %v655 = vpop.f32.mrf.mxu0
  %656 = vmatprep.mubr.bf16.mxu0 0
  %657 = vmatmul.mubr.bf16.gmra.mxu0 %v614
  %v658 = vpop.f32.mrf.mxu0
  %v659 = vadd.f32 0.0, %v658
  %v660 = vpop.f32.mrf.mxu0
  %v661 = vpop.f32.mrf.mxu0
  %v662 = vpop.f32.mrf.mxu0
  %663 = vdwg.mxu0
  %v664 = vpack.c.bf16 %v654, %v651
  %v665 = vpack.c.bf16 %v659, %v659
  %v666 = vld [vmem:[#allocation2] sm:$0x1]
  %v668 = vlaneseq
  %v669 = vshrl.u32 %v668, 7
  %v670 = vsub.s32 0, %v669
  %v671 = vrot.slane %v666, %v670
  %v674 = vsel %vm115, %v665, 0
  %676 = vmatprep.subr.bf16.mxu0 0
  %677 = vmatpush1.bf16.msra.mxu0 0
  %678 = vmatprep.subr.bf16.mxu0 0
  %679 = vmatpush1.bf16.msra.mxu0 0
  %680 = vmatprep.subr.bf16.mxu0 0
  %681 = vmatpush1.bf16.msra.mxu0 0
  %682 = vmatprep.subr.bf16.mxu0 0
  %683 = vmatpush1.bf16.msra.mxu0 0
  %684 = vmatprep.subr.bf16.mxu0 0
  %685 = vmatpush1.bf16.msra.mxu0 0
  %686 = vmatprep.subr.bf16.mxu0 0
  %687 = vmatpush1.bf16.msra.mxu0 0
  %688 = vmatprep.subr.bf16.mxu0 0
  %689 = vmatpush1.bf16.msra.mxu0 %v674
  %690 = vmatprep.subr.bf16.mxu0 0
  %691 = vmatpush1.bf16.msra.mxu0 %v664
  %692 = vmatprep.subr.bf16.mxu0 0
  %693 = vmatpush2.bf16.msra.mxu0 0
  %694 = vmatprep.subr.bf16.mxu0 0
  %695 = vmatpush2.bf16.msra.mxu0 0
  %696 = vmatprep.subr.bf16.mxu0 0
  %697 = vmatpush2.bf16.msra.mxu0 0
  %698 = vmatprep.subr.bf16.mxu0 0
  %699 = vmatpush2.bf16.msra.mxu0 0
  %700 = vmatprep.subr.bf16.mxu0 0
  %701 = vmatpush2.bf16.msra.mxu0 0
  %702 = vmatprep.subr.bf16.mxu0 0
  %703 = vmatpush2.bf16.msra.mxu0 0
  %704 = vmatprep.subr.bf16.mxu0 0
  %705 = vmatpush2.bf16.msra.mxu0 0
  %706 = vmatprep.subr.bf16.mxu0 0
  %707 = vmatpush2.bf16.msra.mxu0 0
  %708 = vmatprep.mubr.bf16.mxu0 0
  %709 = vmatmul.mubr.bf16.gmra.mxu0 %v110
  %v710 = vpop.f32.mrf.mxu0
  %v711 = vadd.f32 %v671, %v710
  %v712 = vpop.f32.mrf.mxu0
  %v713 = vpop.f32.mrf.mxu0
  %v714 = vadd.f32 %v671, %v713
  %v715 = vpop.f32.mrf.mxu0
  %716 = vmatprep.mubr.bf16.mxu0 0
  %717 = vmatmul.mubr.bf16.gmra.mxu0 %v113
  %v718 = vpop.f32.mrf.mxu0
  %v719 = vadd.f32 %v671, %v718
  %v720 = vpop.f32.mrf.mxu0
  %v721 = vpop.f32.mrf.mxu0
  %v722 = vpop.f32.mrf.mxu0
  %723 = vdwg.mxu0
  %v724 = vtanh.pop %v711
  %v725 = vtanh.pop %v714
  %v726 = vtanh.pop %v719
  %vm727 = vcmask 7168
  %728 = vst.msk [vmem:[%s7] sm:$0xff] %vm727, %v724
  %729 = vst.msk [vmem:[%s7 + $0x8] sm:$0xff] %vm727, %v725
  %730 = vst.msk [vmem:[%s7 + $0x10] sm:$0xff] %vm727, %v726
  // Predicated region
  $region26: #{dgcnn_forward.2} parent=0 // pred_check
    _
  $region27: #{dgcnn_forward.2} parent=0 // pred_check_branch
    %732 = sbr.rel (0) target = $region29
  $region28: #{dgcnn_forward.2} parent=0 // pred_region
    _
  $region29: #{dgcnn_forward.2} parent=0 // pred_fallthru
    _
  // Predicated region
  $region30: #{dgcnn_forward.2} parent=0 // pred_check
    _
  $region31: #{dgcnn_forward.2} parent=0 // pred_check_branch
    %734 = sbr.rel (0) target = $region33
  $region32: #{dgcnn_forward.2} parent=0 // pred_region
    _
  $region33: #{dgcnn_forward.2} parent=0 // pred_fallthru
    _
  // Predicated region
  $region34: #{dgcnn_forward.2} parent=0 // pred_check
    _
  $region35: #{dgcnn_forward.2} parent=0 // pred_check_branch
    %736 = sbr.rel (0) target = $region37
  $region36: #{dgcnn_forward.2} parent=0 // pred_region
    _
  $region37: #{dgcnn_forward.2} parent=0 // pred_fallthru
    _
  // Predicated region
  $region38: #{dgcnn_forward.2} parent=0 // pred_check
    _
  $region39: #{dgcnn_forward.2} parent=0 // pred_check_branch
    %738 = sbr.rel (0) target = $region41
  $region40: #{dgcnn_forward.2} parent=0 // pred_region
    _
  $region41: #{dgcnn_forward.2} parent=0 // pred_fallthru
    _

// kernel: dgcnn_forward.3
$region0: #{dgcnn_forward.3}
  #allocation0 [shape = 'u32[]', space=smem, size = 0x4, offset = 0x4, fixed_abs, tag = 'smem constant byte address 0x4 - core index']
  #allocation1 [shape = 'u32[144,128]{1,0:T(1,128)}', space=vmem, size = 0x12000, scoped, tag = 'internal scratch']
  #allocation2 [shape = 'f32[2,128]{1,0:T(2,128)}', space=vmem, size = 0x400, scoped, tag = 'scratch operand']
  #allocation3 [shape = 'f32[1,1]{1,0:T(1,128)S(1)}', space=vmem, size = 0x200, scoped, tag = 'scoped memory for dgcnn_forward.3']
  %s0 = inlined_call_operand.vmem [shape: f32[16,256], index: 0, kind: input, shape index: {}]
  %s1 = inlined_call_operand.vmem [shape: f32[16,256], index: 1, kind: input, shape index: {}]
  %s2 = inlined_call_operand.vmem [shape: f32[256,16], index: 2, kind: input, shape index: {}]
  %s3 = inlined_call_operand.vmem [shape: f32[1,16], index: 3, kind: input, shape index: {}]
  %s4 = inlined_call_operand.vmem [shape: f32[128,32], index: 4, kind: input, shape index: {}]
  %s5 = inlined_call_operand.vmem [shape: f32[1,32], index: 5, kind: input, shape index: {}]
  %s6 = inlined_call_operand.vmem [shape: f32[32,128], index: 6, kind: input, shape index: {}]
  %s7 = inlined_call_operand.vmem [shape: f32[1,128], index: 7, kind: input, shape index: {}]
  %s8 = inlined_call_operand.vmem [shape: f32[128,1], index: 8, kind: input, shape index: {}]
  %s9 = inlined_call_operand.<no memory space> [shape: f32[1,1], index: 9, kind: input, shape index: {}]
  %s10 = inlined_call_operand.vmem [shape: f32[2,1], index: 10, kind: output, shape index: {}]
  %s11 = sld [smem:[#allocation0]]
  $region50: #{dgcnn_forward.3} parent=0
    _
  %s13 = ssub.s32 1, %s11
  %s14 = scalar_select 0, %s13, %s11
  %v15 = vstv %s9
  %16 = vst [vmem:[#allocation3] sm:$0x1] %v15
  // Predicated region
  $region2: #{dgcnn_forward.3} parent=0 // pred_check
    _
  $region3: #{dgcnn_forward.3} parent=0 // pred_check_branch
    %18 = sbr.rel (0) target = $region5
  $region4: #{dgcnn_forward.3} parent=0 // pred_region
    _
  $region5: #{dgcnn_forward.3} parent=0 // pred_fallthru
    _
  // Predicated region
  $region6: #{dgcnn_forward.3} parent=0 // pred_check
    _
  $region7: #{dgcnn_forward.3} parent=0 // pred_check_branch
    %20 = sbr.rel (0) target = $region9
  $region8: #{dgcnn_forward.3} parent=0 // pred_region
    _
  $region9: #{dgcnn_forward.3} parent=0 // pred_fallthru
    _
  // Predicated region
  $region10: #{dgcnn_forward.3} parent=0 // pred_check
    _
  $region11: #{dgcnn_forward.3} parent=0 // pred_check_branch
    %22 = sbr.rel (0) target = $region13
  $region12: #{dgcnn_forward.3} parent=0 // pred_region
    _
  $region13: #{dgcnn_forward.3} parent=0 // pred_fallthru
    _
  // Predicated region
  $region14: #{dgcnn_forward.3} parent=0 // pred_check
    _
  $region15: #{dgcnn_forward.3} parent=0 // pred_check_branch
    %24 = sbr.rel (0) target = $region17
  $region16: #{dgcnn_forward.3} parent=0 // pred_region
    _
  $region17: #{dgcnn_forward.3} parent=0 // pred_fallthru
    _
  // Predicated region
  $region18: #{dgcnn_forward.3} parent=0 // pred_check
    _
  $region19: #{dgcnn_forward.3} parent=0 // pred_check_branch
    %26 = sbr.rel (0) target = $region21
  $region20: #{dgcnn_forward.3} parent=0 // pred_region
    _
  $region21: #{dgcnn_forward.3} parent=0 // pred_fallthru
    _
  // Predicated region
  $region22: #{dgcnn_forward.3} parent=0 // pred_check
    _
  $region23: #{dgcnn_forward.3} parent=0 // pred_check_branch
    %28 = sbr.rel (0) target = $region25
  $region24: #{dgcnn_forward.3} parent=0 // pred_region
    _
  $region25: #{dgcnn_forward.3} parent=0 // pred_fallthru
    _
  // Predicated region
  $region26: #{dgcnn_forward.3} parent=0 // pred_check
    _
  $region27: #{dgcnn_forward.3} parent=0 // pred_check_branch
    %30 = sbr.rel (0) target = $region29
  $region28: #{dgcnn_forward.3} parent=0 // pred_region
    _
  $region29: #{dgcnn_forward.3} parent=0 // pred_fallthru
    _
  // Predicated region
  $region30: #{dgcnn_forward.3} parent=0 // pred_check
    _
  $region31: #{dgcnn_forward.3} parent=0 // pred_check_branch
    %32 = sbr.rel (0) target = $region33
  $region32: #{dgcnn_forward.3} parent=0 // pred_region
    _
  $region33: #{dgcnn_forward.3} parent=0 // pred_fallthru
    _
  // Predicated region
  $region34: #{dgcnn_forward.3} parent=0 // pred_check
    _
  $region35: #{dgcnn_forward.3} parent=0 // pred_check_branch
    %34 = sbr.rel (0) target = $region37
  $region36: #{dgcnn_forward.3} parent=0 // pred_region
    _
  $region37: #{dgcnn_forward.3} parent=0 // pred_fallthru
    _
  // Predicated region
  $region38: #{dgcnn_forward.3} parent=0 // pred_check
    _
  $region39: #{dgcnn_forward.3} parent=0 // pred_check_branch
    %36 = sbr.rel (0) target = $region41
  $region40: #{dgcnn_forward.3} parent=0 // pred_region
    _
  $region41: #{dgcnn_forward.3} parent=0 // pred_fallthru
    _
  %v38 = vld [vmem:[%s2] sm:$0xff]
  %v39 = vld [vmem:[%s2 + $0x8] sm:$0xff]
  %v40 = vld [vmem:[%s2 + $0x10] sm:$0xff]
  %v41 = vld [vmem:[%s2 + $0x18] sm:$0xff]
  %v42 = vld [vmem:[%s2 + $0x20] sm:$0xff]
  %v43 = vld [vmem:[%s2 + $0x28] sm:$0xff]
  %v44 = vld [vmem:[%s2 + $0x30] sm:$0xff]
  %v45 = vld [vmem:[%s2 + $0x38] sm:$0xff]
  %v46 = vld [vmem:[%s2 + $0x40] sm:$0xff]
  %v47 = vld [vmem:[%s2 + $0x48] sm:$0xff]
  %v48 = vld [vmem:[%s2 + $0x50] sm:$0xff]
  %v49 = vld [vmem:[%s2 + $0x58] sm:$0xff]
  %v50 = vld [vmem:[%s2 + $0x60] sm:$0xff]
  %v51 = vld [vmem:[%s2 + $0x68] sm:$0xff]
  %v52 = vld [vmem:[%s2 + $0x70] sm:$0xff]
  %v53 = vld [vmem:[%s2 + $0x78] sm:$0xff]
  %v54 = vld [vmem:[%s2 + $0x80] sm:$0xff]
  %v55 = vld [vmem:[%s2 + $0x88] sm:$0xff]
  %v56 = vld [vmem:[%s2 + $0x90] sm:$0xff]
  %v57 = vld [vmem:[%s2 + $0x98] sm:$0xff]
  %v58 = vld [vmem:[%s2 + $0xa0] sm:$0xff]
  %v59 = vld [vmem:[%s2 + $0xa8] sm:$0xff]
  %v60 = vld [vmem:[%s2 + $0xb0] sm:$0xff]
  %v61 = vld [vmem:[%s2 + $0xb8] sm:$0xff]
  %v62 = vld [vmem:[%s2 + $0xc0] sm:$0xff]
  %v63 = vld [vmem:[%s2 + $0xc8] sm:$0xff]
  %v64 = vld [vmem:[%s2 + $0xd0] sm:$0xff]
  %v65 = vld [vmem:[%s2 + $0xd8] sm:$0xff]
  %v66 = vld [vmem:[%s2 + $0xe0] sm:$0xff]
  %v67 = vld [vmem:[%s2 + $0xe8] sm:$0xff]
  %v68 = vld [vmem:[%s2 + $0xf0] sm:$0xff]
  %v69 = vld [vmem:[%s2 + $0xf8] sm:$0xff]
  %v70 = vpack.c.bf16 %v39, %v38
  %v71 = vpack.c.bf16 %v41, %v40
  %v72 = vpack.c.bf16 %v43, %v42
  %v73 = vpack.c.bf16 %v45, %v44
  %v74 = vpack.c.bf16 %v47, %v46
  %v75 = vpack.c.bf16 %v49, %v48
  %v76 = vpack.c.bf16 %v51, %v50
  %v77 = vpack.c.bf16 %v53, %v52
  %v78 = vpack.c.bf16 %v55, %v54
  %v79 = vpack.c.bf16 %v57, %v56
  %v80 = vpack.c.bf16 %v59, %v58
  %v81 = vpack.c.bf16 %v61, %v60
  %v82 = vpack.c.bf16 %v63, %v62
  %v83 = vpack.c.bf16 %v65, %v64
  %v84 = vpack.c.bf16 %v67, %v66
  %v85 = vpack.c.bf16 %v69, %v68
  %v86 = vld [vmem:[%s0] sm:$0xff]
  %v87 = vld [vmem:[%s0 + $0x8] sm:$0xff]
  %v88 = vld [vmem:[%s0 + $0x10] sm:$0xff]
  %v89 = vld [vmem:[%s0 + $0x18] sm:$0xff]
  %v90 = vpack.c.bf16 %v88, %v86
  %v91 = vpack.c.bf16 %v89, %v87
  %v92 = vld [vmem:[%s3] sm:$0x1]
  %v94 = vlaneseq
  %v95 = vshrl.u32 %v94, 7
  %v96 = vsub.s32 0, %v95
  %v97 = vrot.slane %v92, %v96
  %99 = vmatprep.subr.bf16.mxu0 0
  %100 = vmatpush1.bf16.msra.mxu0 %v77
  %101 = vmatprep.subr.bf16.mxu0 0
  %102 = vmatpush1.bf16.msra.mxu0 %v76
  %103 = vmatprep.subr.bf16.mxu0 0
  %104 = vmatpush1.bf16.msra.mxu0 %v75
  %105 = vmatprep.subr.bf16.mxu0 0
  %106 = vmatpush1.bf16.msra.mxu0 %v74
  %107 = vmatprep.subr.bf16.mxu0 0
  %108 = vmatpush1.bf16.msra.mxu0 %v73
  %109 = vmatprep.subr.bf16.mxu0 0
  %110 = vmatpush1.bf16.msra.mxu0 %v72
  %111 = vmatprep.subr.bf16.mxu0 0
  %112 = vmatpush1.bf16.msra.mxu0 %v71
  %113 = vmatprep.subr.bf16.mxu0 0
  %114 = vmatpush1.bf16.msra.mxu0 %v70
  %115 = vmatprep.subr.bf16.mxu0 0
  %116 = vmatpush2.bf16.msra.mxu0 %v85
  %117 = vmatprep.subr.bf16.mxu0 0
  %118 = vmatpush2.bf16.msra.mxu0 %v84
  %119 = vmatprep.subr.bf16.mxu0 0
  %120 = vmatpush2.bf16.msra.mxu0 %v83
  %121 = vmatprep.subr.bf16.mxu0 0
  %122 = vmatpush2.bf16.msra.mxu0 %v82
  %123 = vmatprep.subr.bf16.mxu0 0
  %124 = vmatpush2.bf16.msra.mxu0 %v81
  %125 = vmatprep.subr.bf16.mxu0 0
  %126 = vmatpush2.bf16.msra.mxu0 %v80
  %127 = vmatprep.subr.bf16.mxu0 0
  %128 = vmatpush2.bf16.msra.mxu0 %v79
  %129 = vmatprep.subr.bf16.mxu0 0
  %130 = vmatpush2.bf16.msra.mxu0 %v78
  %131 = vmatprep.mubr.bf16.mxu0 %v91
  %132 = vmatmul.mubr.bf16.gmra.mxu0 %v90
  %v133 = vpop.f32.mrf.mxu0
  %v134 = vadd.f32 %v97, %v133
  %v135 = vpop.f32.mrf.mxu0
  %v136 = vpop.f32.mrf.mxu0
  %v137 = vadd.f32 %v97, %v136
  %v138 = vpop.f32.mrf.mxu0
  %139 = vdwg.mxu0
  %v140 = vmax.f32 %v134, 0.0
  %v141 = vmax.f32 %v137, 0.0
  %v142 = vld [vmem:[%s1] sm:$0xff]
  %v143 = vld [vmem:[%s1 + $0x8] sm:$0xff]
  %v144 = vld [vmem:[%s1 + $0x10] sm:$0xff]
  %v145 = vld [vmem:[%s1 + $0x18] sm:$0xff]
  %v146 = vpack.c.bf16 %v144, %v142
  %v147 = vpack.c.bf16 %v145, %v143
  %148 = vmatprep.subr.bf16.mxu0 0
  %149 = vmatpush1.bf16.msra.mxu0 %v77
  %150 = vmatprep.subr.bf16.mxu0 0
  %151 = vmatpush1.bf16.msra.mxu0 %v76
  %152 = vmatprep.subr.bf16.mxu0 0
  %153 = vmatpush1.bf16.msra.mxu0 %v75
  %154 = vmatprep.subr.bf16.mxu0 0
  %155 = vmatpush1.bf16.msra.mxu0 %v74
  %156 = vmatprep.subr.bf16.mxu0 0
  %157 = vmatpush1.bf16.msra.mxu0 %v73
  %158 = vmatprep.subr.bf16.mxu0 0
  %159 = vmatpush1.bf16.msra.mxu0 %v72
  %160 = vmatprep.subr.bf16.mxu0 0
  %161 = vmatpush1.bf16.msra.mxu0 %v71
  %162 = vmatprep.subr.bf16.mxu0 0
  %163 = vmatpush1.bf16.msra.mxu0 %v70
  %164 = vmatprep.subr.bf16.mxu0 0
  %165 = vmatpush2.bf16.msra.mxu0 %v85
  %166 = vmatprep.subr.bf16.mxu0 0
  %167 = vmatpush2.bf16.msra.mxu0 %v84
  %168 = vmatprep.subr.bf16.mxu0 0
  %169 = vmatpush2.bf16.msra.mxu0 %v83
  %170 = vmatprep.subr.bf16.mxu0 0
  %171 = vmatpush2.bf16.msra.mxu0 %v82
  %172 = vmatprep.subr.bf16.mxu0 0
  %173 = vmatpush2.bf16.msra.mxu0 %v81
  %174 = vmatprep.subr.bf16.mxu0 0
  %175 = vmatpush2.bf16.msra.mxu0 %v80
  %176 = vmatprep.subr.bf16.mxu0 0
  %177 = vmatpush2.bf16.msra.mxu0 %v79
  %178 = vmatprep.subr.bf16.mxu0 0
  %179 = vmatpush2.bf16.msra.mxu0 %v78
  %180 = vmatprep.mubr.bf16.mxu0 %v147
  %181 = vmatmul.mubr.bf16.gmra.mxu0 %v146
  %v182 = vpop.f32.mrf.mxu0
  %v183 = vadd.f32 %v97, %v182
  %v184 = vpop.f32.mrf.mxu0
  %v185 = vpop.f32.mrf.mxu0
  %v186 = vadd.f32 %v97, %v185
  %v187 = vpop.f32.mrf.mxu0
  %188 = vdwg.mxu0
  %v189 = vmax.f32 %v183, 0.0
  %v190 = vmax.f32 %v186, 0.0
  %v191 = vmax.f32 %v140, %v189
  %v192 = vmax.f32 %v141, %v190
  %vm193 = vcmask 123904
  %194 = vst.msk [vmem:[#allocation2] sm:$0x3] %vm193, %v191
  %196 = vrot.lane.b32.xlu0 %v191, 16
  %v197 = vpop.permute.xlu0 %196
  %vm199 = vcmask 257154
  %200 = vst.msk [vmem:[#allocation2 - $0x2] sm:$0xc] %vm199, %v197
  %201 = vrot.lane.b32.xlu0 %v191, 32
  %v202 = vpop.permute.xlu0 %201
  %vm204 = vcmask 390404
  %205 = vst.msk [vmem:[#allocation2 - $0x4] sm:$0x30] %vm204, %v202
  %206 = vrot.lane.b32.xlu0 %v191, 48
  %v207 = vpop.permute.xlu0 %206
  %vm209 = vcmask 523654
  %210 = vst.msk [vmem:[#allocation2 - $0x6] sm:$0xc0] %vm209, %v207
  %212 = vrot.lane.b32.xlu0 %v192, 64
  %v213 = vpop.permute.xlu0 %212
  %vm215 = vcmask 648704
  %216 = vst.msk [vmem:[#allocation2] sm:$0x3] %vm215, %v213
  %217 = vrot.lane.b32.xlu0 %v192, 80
  %v218 = vpop.permute.xlu0 %217
  %vm220 = vcmask 781954
  %221 = vst.msk [vmem:[#allocation2 - $0x2] sm:$0xc] %vm220, %v218
  %222 = vrot.lane.b32.xlu0 %v192, 96
  %v223 = vpop.permute.xlu0 %222
  %vm225 = vcmask 915204
  %226 = vst.msk [vmem:[#allocation2 - $0x4] sm:$0x30] %vm225, %v223
  %227 = vrot.lane.b32.xlu0 %v192, 112
  %v228 = vpop.permute.xlu0 %227
  %vm230 = vcmask 1048454
  %231 = vst.msk [vmem:[#allocation2 - $0x6] sm:$0xc0] %vm230, %v228
  %v232 = vld [vmem:[#allocation2] sm:$0x3]
  %v233 = vpack.c.bf16 %v232, %v232
  %v234 = vld [vmem:[%s4] sm:$0xff]
  %v235 = vld [vmem:[%s4 + $0x8] sm:$0xff]
  %v236 = vld [vmem:[%s4 + $0x10] sm:$0xff]
  %v237 = vld [vmem:[%s4 + $0x18] sm:$0xff]
  %v238 = vld [vmem:[%s4 + $0x20] sm:$0xff]
  %v239 = vld [vmem:[%s4 + $0x28] sm:$0xff]
  %v240 = vld [vmem:[%s4 + $0x30] sm:$0xff]
  %v241 = vld [vmem:[%s4 + $0x38] sm:$0xff]
  %v242 = vld [vmem:[%s4 + $0x40] sm:$0xff]
  %v243 = vld [vmem:[%s4 + $0x48] sm:$0xff]
  %v244 = vld [vmem:[%s4 + $0x50] sm:$0xff]
  %v245 = vld [vmem:[%s4 + $0x58] sm:$0xff]
  %v246 = vld [vmem:[%s4 + $0x60] sm:$0xff]
  %v247 = vld [vmem:[%s4 + $0x68] sm:$0xff]
  %v248 = vld [vmem:[%s4 + $0x70] sm:$0xff]
  %v249 = vld [vmem:[%s4 + $0x78] sm:$0xff]
  %v250 = vpack.c.bf16 %v235, %v234
  %v251 = vpack.c.bf16 %v237, %v236
  %v252 = vpack.c.bf16 %v239, %v238
  %v253 = vpack.c.bf16 %v241, %v240
  %v254 = vpack.c.bf16 %v243, %v242
  %v255 = vpack.c.bf16 %v245, %v244
  %v256 = vpack.c.bf16 %v247, %v246
  %v257 = vpack.c.bf16 %v249, %v248
  %v258 = vld [vmem:[%s5] sm:$0x1]
  %v260 = vlaneseq
  %v261 = vshrl.u32 %v260, 7
  %v262 = vsub.s32 0, %v261
  %v263 = vrot.slane %v258, %v262
  %265 = vmatprep.subr.bf16.mxu0 0
  %266 = vmatpush1.bf16.msra.mxu0 %v257
  %267 = vmatprep.subr.bf16.mxu0 0
  %268 = vmatpush1.bf16.msra.mxu0 %v256
  %269 = vmatprep.subr.bf16.mxu0 0
  %270 = vmatpush1.bf16.msra.mxu0 %v255
  %271 = vmatprep.subr.bf16.mxu0 0
  %272 = vmatpush1.bf16.msra.mxu0 %v254
  %273 = vmatprep.subr.bf16.mxu0 0
  %274 = vmatpush1.bf16.msra.mxu0 %v253
  %275 = vmatprep.subr.bf16.mxu0 0
  %276 = vmatpush1.bf16.msra.mxu0 %v252
  %277 = vmatprep.subr.bf16.mxu0 0
  %278 = vmatpush1.bf16.msra.mxu0 %v251
  %279 = vmatprep.subr.bf16.mxu0 0
  %280 = vmatpush1.bf16.msra.mxu0 %v250
  %281 = vmatprep.subr.bf16.mxu0 0
  %282 = vmatpush2.bf16.msra.mxu0 0
  %283 = vmatprep.subr.bf16.mxu0 0
  %284 = vmatpush2.bf16.msra.mxu0 0
  %285 = vmatprep.subr.bf16.mxu0 0
  %286 = vmatpush2.bf16.msra.mxu0 0
  %287 = vmatprep.subr.bf16.mxu0 0
  %288 = vmatpush2.bf16.msra.mxu0 0
  %289 = vmatprep.subr.bf16.mxu0 0
  %290 = vmatpush2.bf16.msra.mxu0 0
  %291 = vmatprep.subr.bf16.mxu0 0
  %292 = vmatpush2.bf16.msra.mxu0 0
  %293 = vmatprep.subr.bf16.mxu0 0
  %294 = vmatpush2.bf16.msra.mxu0 0
  %295 = vmatprep.subr.bf16.mxu0 0
  %296 = vmatpush2.bf16.msra.mxu0 0
  %297 = vmatprep.mubr.bf16.mxu0 0
  %298 = vmatmul.mubr.bf16.gmra.mxu0 %v233
  %v299 = vpop.f32.mrf.mxu0
  %v300 = vadd.f32 %v263, %v299
  %v301 = vpop.f32.mrf.mxu0
  %v302 = vpop.f32.mrf.mxu0
  %v303 = vpop.f32.mrf.mxu0
  %304 = vdwg.mxu0
  %v305 = vmax.f32 %v300, 0.0
  %v306 = vpack.c.bf16 %v305, %v305
  %v307 = vld [vmem:[%s6] sm:$0xff]
  %v308 = vld [vmem:[%s6 + $0x8] sm:$0xff]
  %v309 = vld [vmem:[%s6 + $0x10] sm:$0xff]
  %v310 = vld [vmem:[%s6 + $0x18] sm:$0xff]
  %v311 = vpack.c.bf16 %v308, %v307
  %v312 = vpack.c.bf16 %v310, %v309
  %v313 = vld [vmem:[%s7] sm:$0x1]
  %v315 = vlaneseq
  %v316 = vshrl.u32 %v315, 7
  %v317 = vsub.s32 0, %v316
  %v318 = vrot.slane %v313, %v317
  %vm320 = vcmask 261120
  %v322 = vsel %vm320, %v306, 0
  %324 = vmatprep.subr.bf16.mxu0 0
  %325 = vmatpush1.bf16.msra.mxu0 0
  %326 = vmatprep.subr.bf16.mxu0 0
  %327 = vmatpush1.bf16.msra.mxu0 0
  %328 = vmatprep.subr.bf16.mxu0 0
  %329 = vmatpush1.bf16.msra.mxu0 0
  %330 = vmatprep.subr.bf16.mxu0 0
  %331 = vmatpush1.bf16.msra.mxu0 0
  %332 = vmatprep.subr.bf16.mxu0 0
  %333 = vmatpush1.bf16.msra.mxu0 0
  %334 = vmatprep.subr.bf16.mxu0 0
  %335 = vmatpush1.bf16.msra.mxu0 0
  %336 = vmatprep.subr.bf16.mxu0 0
  %337 = vmatpush1.bf16.msra.mxu0 %v312
  %338 = vmatprep.subr.bf16.mxu0 0
  %339 = vmatpush1.bf16.msra.mxu0 %v311
  %340 = vmatprep.subr.bf16.mxu0 0
  %341 = vmatpush2.bf16.msra.mxu0 0
  %342 = vmatprep.subr.bf16.mxu0 0
  %343 = vmatpush2.bf16.msra.mxu0 0
  %344 = vmatprep.subr.bf16.mxu0 0
  %345 = vmatpush2.bf16.msra.mxu0 0
  %346 = vmatprep.subr.bf16.mxu0 0
  %347 = vmatpush2.bf16.msra.mxu0 0
  %348 = vmatprep.subr.bf16.mxu0 0
  %349 = vmatpush2.bf16.msra.mxu0 0
  %350 = vmatprep.subr.bf16.mxu0 0
  %351 = vmatpush2.bf16.msra.mxu0 0
  %352 = vmatprep.subr.bf16.mxu0 0
  %353 = vmatpush2.bf16.msra.mxu0 0
  %354 = vmatprep.subr.bf16.mxu0 0
  %355 = vmatpush2.bf16.msra.mxu0 0
  %356 = vmatprep.mubr.bf16.mxu0 0
  %357 = vmatmul.mubr.bf16.gmra.mxu0 %v322
  %v358 = vpop.f32.mrf.mxu0
  %v359 = vadd.f32 %v318, %v358
  %v360 = vpop.f32.mrf.mxu0
  %v361 = vpop.f32.mrf.mxu0
  %v362 = vpop.f32.mrf.mxu0
  %363 = vdwg.mxu0
  %v364 = vmax.f32 %v359, 0.0
  %v365 = vpack.c.bf16 %v364, %v364
  %v366 = vld [vmem:[%s8] sm:$0xff]
  %v367 = vld [vmem:[%s8 + $0x8] sm:$0xff]
  %v368 = vld [vmem:[%s8 + $0x10] sm:$0xff]
  %v369 = vld [vmem:[%s8 + $0x18] sm:$0xff]
  %v370 = vld [vmem:[%s8 + $0x20] sm:$0xff]
  %v371 = vld [vmem:[%s8 + $0x28] sm:$0xff]
  %v372 = vld [vmem:[%s8 + $0x30] sm:$0xff]
  %v373 = vld [vmem:[%s8 + $0x38] sm:$0xff]
  %v374 = vld [vmem:[%s8 + $0x40] sm:$0xff]
  %v375 = vld [vmem:[%s8 + $0x48] sm:$0xff]
  %v376 = vld [vmem:[%s8 + $0x50] sm:$0xff]
  %v377 = vld [vmem:[%s8 + $0x58] sm:$0xff]
  %v378 = vld [vmem:[%s8 + $0x60] sm:$0xff]
  %v379 = vld [vmem:[%s8 + $0x68] sm:$0xff]
  %v380 = vld [vmem:[%s8 + $0x70] sm:$0xff]
  %v381 = vld [vmem:[%s8 + $0x78] sm:$0xff]
  %v382 = vpack.c.bf16 %v367, %v366
  %v383 = vpack.c.bf16 %v369, %v368
  %v384 = vpack.c.bf16 %v371, %v370
  %v385 = vpack.c.bf16 %v373, %v372
  %v386 = vpack.c.bf16 %v375, %v374
  %v387 = vpack.c.bf16 %v377, %v376
  %v388 = vpack.c.bf16 %v379, %v378
  %v389 = vpack.c.bf16 %v381, %v380
  %v390 = vld [vmem:[#allocation3] sm:$0x1]
  %v392 = vlaneseq
  %v393 = vshrl.u32 %v392, 7
  %v394 = vsub.s32 0, %v393
  %v395 = vrot.slane %v390, %v394
  %397 = vmatprep.subr.bf16.mxu0 0
  %398 = vmatpush1.bf16.msra.mxu0 %v389
  %399 = vmatprep.subr.bf16.mxu0 0
  %400 = vmatpush1.bf16.msra.mxu0 %v388
  %401 = vmatprep.subr.bf16.mxu0 0
  %402 = vmatpush1.bf16.msra.mxu0 %v387
  %403 = vmatprep.subr.bf16.mxu0 0
  %404 = vmatpush1.bf16.msra.mxu0 %v386
  %405 = vmatprep.subr.bf16.mxu0 0
  %406 = vmatpush1.bf16.msra.mxu0 %v385
  %407 = vmatprep.subr.bf16.mxu0 0
  %408 = vmatpush1.bf16.msra.mxu0 %v384
  %409 = vmatprep.subr.bf16.mxu0 0
  %410 = vmatpush1.bf16.msra.mxu0 %v383
  %411 = vmatprep.subr.bf16.mxu0 0
  %412 = vmatpush1.bf16.msra.mxu0 %v382
  %413 = vmatprep.subr.bf16.mxu0 0
  %414 = vmatpush2.bf16.msra.mxu0 0
  %415 = vmatprep.subr.bf16.mxu0 0
  %416 = vmatpush2.bf16.msra.mxu0 0
  %417 = vmatprep.subr.bf16.mxu0 0
  %418 = vmatpush2.bf16.msra.mxu0 0
  %419 = vmatprep.subr.bf16.mxu0 0
  %420 = vmatpush2.bf16.msra.mxu0 0
  %421 = vmatprep.subr.bf16.mxu0 0
  %422 = vmatpush2.bf16.msra.mxu0 0
  %423 = vmatprep.subr.bf16.mxu0 0
  %424 = vmatpush2.bf16.msra.mxu0 0
  %425 = vmatprep.subr.bf16.mxu0 0
  %426 = vmatpush2.bf16.msra.mxu0 0
  %427 = vmatprep.subr.bf16.mxu0 0
  %428 = vmatpush2.bf16.msra.mxu0 0
  %429 = vmatprep.mubr.bf16.mxu0 0
  %430 = vmatmul.mubr.bf16.gmra.mxu0 %v365
  %v431 = vpop.f32.mrf.mxu0
  %v432 = vadd.f32 %v395, %v431
  %v433 = vpop.f32.mrf.mxu0
  %v434 = vpop.f32.mrf.mxu0
  %v435 = vpop.f32.mrf.mxu0
  %436 = vdwg.mxu0
  %vm437 = vcmask 1024
  %438 = vst.msk [vmem:[%s10] sm:$0x3] %vm437, %v432
  // Predicated region
  $region42: #{dgcnn_forward.3} parent=0 // pred_check
    _
  $region43: #{dgcnn_forward.3} parent=0 // pred_check_branch
    %440 = sbr.rel (0) target = $region45
  $region44: #{dgcnn_forward.3} parent=0 // pred_region
    _
  $region45: #{dgcnn_forward.3} parent=0 // pred_fallthru
    _
  // Predicated region
  $region46: #{dgcnn_forward.3} parent=0 // pred_check
    _
  $region47: #{dgcnn_forward.3} parent=0 // pred_check_branch
    %442 = sbr.rel (0) target = $region49
  $region48: #{dgcnn_forward.3} parent=0 // pred_region
    _
  $region49: #{dgcnn_forward.3} parent=0 // pred_fallthru
    _

</llo_original>
